<compile_context>
chip_gen: v7x
topology: tpu7x:2x2x1
jax: 0.10.0
libtpu: 0.0.40
codegen_flags: <defaults>
</compile_context>

<pallas_src>
import jax
import jax.numpy as jnp
from jax.experimental import pallas as pl
from jax.experimental.pallas import tpu as pltpu


def mhfa_kernel(kv_ref, w_att_ref, b_att_ref, wvT_ref, bv_ref, pooled_ref):
    """Per grid step: Bblk batch elements.

    kv_ref     : (Bblk, 2, T, D) bf16  layer-reduced k (index 0) / v (index 1)
    w_att_ref  : (D, H)          bf16  folded cmp_linear_k + att_head weights
    b_att_ref  : (1, H)          f32   folded bias
    wvT_ref    : (D, C)          bf16  cmp_linear_v weight (transposed)
    bv_ref     : (1, C)          f32
    pooled_ref : (Bblk, H*C)     f32   attentive-pooled output (h-major flat)
    """
    Bblk = kv_ref.shape[0]
    T = kv_ref.shape[2]
    D = kv_ref.shape[3]
    H = w_att_ref.shape[1]
    C = wvT_ref.shape[1]

    k = kv_ref[:, 0].reshape(Bblk * T, D)                                # bf16
    v = kv_ref[:, 1].reshape(Bblk * T, D)                                # bf16

    # Folded compression+attention linear: one bf16 MXU matmul, f32 accum.
    att = jnp.dot(k, w_att_ref[...],
                  preferred_element_type=jnp.float32) + b_att_ref[...]   # (Bblk*T, H)
    # Value compression.
    vc = jnp.dot(v, wvT_ref[...],
                 preferred_element_type=jnp.float32) + bv_ref[...]       # (Bblk*T, C)

    # Softmax over time, independently per batch element.
    att3 = att.reshape(Bblk, T, H)
    m = jnp.max(att3, axis=1, keepdims=True)
    e = jnp.exp(att3 - m)
    denom = jnp.sum(e, axis=1, keepdims=True)
    att_soft = (e * pl.reciprocal(denom, approx=True)).astype(jnp.bfloat16)  # (Bblk,T,H)

    vc3 = vc.astype(jnp.bfloat16).reshape(Bblk, T, C)

    # pooled[b, h, c] = sum_t att_soft[b, t, h] * vc[b, t, c]  (bf16 MXU, f32 accum)
    pooled = jnp.einsum('bth,btc->bhc', att_soft, vc3,
                        preferred_element_type=jnp.float32)              # (Bblk, H, C)

    # Lane-dense, h-major flat store (matches PyTorch reshape(b, -1)); with
    # C a multiple of 128 each per-head store is an unmasked aligned vst.
    for h in range(H):
        pooled_ref[:, h * C:(h + 1) * C] = pooled[:, h, :]


def _pick_block_b(B, T, D, block_b, vmem_budget_bytes):
    """Batch block size: multiple of 8 (sublane-legal flat output block),
    double-buffered kv block fits the (v7x-safe) VMEM budget, and -- when the
    batch allows -- at least 2 grid steps so the parallel axis can shard
    across v7x's two TensorCores."""
    def kv_bytes(bb):
        return 2 * bb * 2 * T * D * 2          # 2 buffers x (bb,2,T,D) bf16

    bb = max(8, (block_b // 8) * 8)
    while bb > 8 and kv_bytes(bb) > vmem_budget_bytes:
        bb -= 8
    if B > 8:
        half = max(8, ((pl.cdiv(B, 2) + 7) // 8) * 8)
        bb = min(bb, half)
    return bb
    # TODO(synk): when even Bblk=8 at full T exceeds the v7x VMEM budget, add a
    # second grid axis over T with an online-softmax accumulator so the block
    # size decouples from T.


def mhfa_forward(x_bdt_l, params, block_b=8, vmem_budget_bytes=40 * 1024 * 1024):
    """x_bdt_l: (B, D, T, L) float32 (native PyTorch layout). Returns (B, O)."""
    x = x_bdt_l
    B, D, T, L = x.shape
    assert T % 8 == 0, "T must be a multiple of 8"
    # TODO(synk): support unaligned T by padding + masking the time softmax.

    Wk, bk = params['Wk'], params['bk']          # (C, D), (C,)
    Wv, bv = params['Wv'], params['bv']          # (C, D), (C,)
    Wa, ba = params['Wa'], params['ba']          # (H, C), (H,)
    Wp, bp = params['Wp'], params['bp']          # (O, H*C), (O,)
    C = Wk.shape[0]
    H = Wa.shape[0]

    # --- XLA glue 1: 13-layer softmax-weighted reduction on the NATIVE layout,
    #     emitted directly in bf16 (no f32 kv intermediate round trip). ---
    wk_soft = jax.nn.softmax(params['weights_k'])
    wv_soft = jax.nn.softmax(params['weights_v'])
    w2 = jnp.stack([wk_soft, wv_soft], axis=-1)                        # (L, 2)
    kv = jnp.einsum('bdtl,lw->bwtd', x, w2).astype(jnp.bfloat16)       # (B, 2, T, D)

    # --- batch blocking (pad B up to a multiple of Bblk; padded rows are zero,
    #     softmax over their bias-only logits is finite, rows sliced off below). ---
    Bblk = _pick_block_b(B, T, D, block_b, vmem_budget_bytes)
    Bp = pl.cdiv(B, Bblk) * Bblk
    if Bp != B:
        kv = jnp.pad(kv, ((0, Bp - B), (0, 0), (0, 0), (0, 0)))

    # --- parameter prep: fold cmp_linear_k into att_head; all MXU weights bf16. ---
    w_att = (Wk.T.astype(jnp.float32) @ Wa.T.astype(jnp.float32)).astype(jnp.bfloat16)  # (D, H)
    b_att = (bk @ Wa.T + ba).reshape(1, H).astype(jnp.float32)
    wvT = Wv.T.astype(jnp.bfloat16)                                    # (D, C)
    bv2 = bv.reshape(1, C).astype(jnp.float32)

    const = lambda shape: pl.BlockSpec(shape, lambda b, _s=len(shape): (0,) * _s)

    # VMEM estimate (double-buffered kv + weights + out block + intermediates).
    vmem_est = (2 * Bblk * 2 * T * D * 2
                + 2 * (D * H + D * C) * 2
                + 2 * Bblk * H * C * 4
                + 4 * Bblk * T * (C + H) * 4
                + (4 << 20))
    vmem_limit = int(min(max(vmem_est, 32 << 20), 64 << 20))

    pooled = pl.pallas_call(
        mhfa_kernel,
        out_shape=jax.ShapeDtypeStruct((Bp, H * C), jnp.float32),
        grid=(Bp // Bblk,),
        in_specs=[
            pl.BlockSpec((Bblk, 2, T, D), lambda b: (b, 0, 0, 0)),     # kv rows
            const((D, H)), const((1, H)),                              # folded W_att, b_att
            const((D, C)), const((1, C)),                              # Wv^T, bv
        ],
        out_specs=pl.BlockSpec((Bblk, H * C), lambda b: (b, 0)),
        compiler_params=pltpu.CompilerParams(
            dimension_semantics=("parallel",),
            vmem_limit_bytes=vmem_limit,
        ),
    )(kv, w_att, b_att, wvT, bv2)

    # --- XLA glue 2: final FC as one GEMM (flatten already done in-kernel). ---
    return pooled[:B] @ Wp.T + bp


def mhfa_reference(x_bdt_l, params):
    """Plain-JAX (f32) replica of the PyTorch forward for verification."""
    wk = jax.nn.softmax(params['weights_k'])
    wv = jax.nn.softmax(params['weights_v'])
    k = jnp.sum(x_bdt_l * wk, axis=-1).transpose(0, 2, 1)        # (B, T, D)
    v = jnp.sum(x_bdt_l * wv, axis=-1).transpose(0, 2, 1)        # (B, T, D)
    k = k @ params['Wk'].T + params['bk']                        # (B, T, C)
    v = v @ params['Wv'].T + params['bv']                        # (B, T, C)
    att_k = k @ params['Wa'].T + params['ba']                    # (B, T, H)
    att = jax.nn.softmax(att_k, axis=1)                          # over time
    pooled = jnp.sum(v[:, :, None, :] * att[..., None], axis=1)  # (B, H, C)
    b, h, f = pooled.shape
    return pooled.reshape(b, h * f) @ params['Wp'].T + params['bp']


if __name__ == "__main__":
    # Small shapes consistent with the module structure (L=13 wavLM layers),
    # chosen lane/sublane aligned (D, C multiples of 128; T multiple of 8).
    B, D, T, L = 12, 256, 32, 13       # batch, inputs_dim, seq, num layers
    H, C, O = 8, 128, 64               # head_nb, compression_dim, outputs_dim

    key = jax.random.PRNGKey(0)
    ks = jax.random.split(key, 10)

    params = {
        # PyTorch init: ones(13) for the layer weights
        'weights_k': jnp.ones((L,), jnp.float32),
        'weights_v': jnp.ones((L,), jnp.float32),
        # Synthetic linear weights (PyTorch Linear shapes: (out, in))
        'Wk': 0.1 * jax.random.normal(ks[0], (C, D), jnp.float32),
        'bk': 0.1 * jax.random.normal(ks[1], (C,), jnp.float32),
        'Wv': 0.1 * jax.random.normal(ks[2], (C, D), jnp.float32),
        'bv': 0.1 * jax.random.normal(ks[3], (C,), jnp.float32),
        'Wa': 0.1 * jax.random.normal(ks[4], (H, C), jnp.float32),
        'ba': 0.1 * jax.random.normal(ks[5], (H,), jnp.float32),
        'Wp': 0.1 * jax.random.normal(ks[6], (O, H * C), jnp.float32),
        'bp': 0.1 * jax.random.normal(ks[7], (O,), jnp.float32),
    }

    x = jax.random.normal(ks[8], (B, D, T, L), jnp.float32)

    fwd = jax.jit(lambda xx: mhfa_forward(xx, params))
    out = jax.block_until_ready(fwd(x))
    ref = jax.block_until_ready(mhfa_reference(x, params))

    assert out.shape == (B, O), out.shape
    # bf16 streaming inputs / bf16 MXU operands with f32 accumulation.
    max_err = float(jnp.max(jnp.abs(out - ref)))
    assert jnp.allclose(out, ref, rtol=2e-2, atol=2e-2), max_err
    print("KERNEL_OK")
</pallas_src>

<mosaic_0001>
module attributes {stable_mosaic.version = 11 : i64} {
  func.func @mhfa_kernel(%arg0: i32, %arg1: memref<8x2x32x256xbf16, #tpu.memory_space<vmem>>, %arg2: memref<256x8xbf16, #tpu.memory_space<vmem>>, %arg3: memref<1x8xf32, #tpu.memory_space<vmem>>, %arg4: memref<256x128xbf16, #tpu.memory_space<vmem>>, %arg5: memref<1x128xf32, #tpu.memory_space<vmem>>, %arg6: memref<8x1024xf32, #tpu.memory_space<vmem>>) attributes {dimension_semantics = [#tpu.dimension_semantics<parallel>], iteration_bounds = array<i64: 2>, scalar_prefetch = 0 : i64, scratch_operands = 0 : i64, tpu.core_type = #tpu.core_type<tc>, window_params = [{transform_indices = @transform_0, window_bounds = array<i64: 8, 2, 32, 256>}, {pipeline_mode = #tpu.pipeline_mode<synchronous>, transform_indices = @transform_1, window_bounds = array<i64: 256, 8>}, {pipeline_mode = #tpu.pipeline_mode<synchronous>, transform_indices = @transform_2, window_bounds = array<i64: 1, 8>}, {pipeline_mode = #tpu.pipeline_mode<synchronous>, transform_indices = @transform_3, window_bounds = array<i64: 256, 128>}, {pipeline_mode = #tpu.pipeline_mode<synchronous>, transform_indices = @transform_4, window_bounds = array<i64: 1, 128>}, {transform_indices = @transform_5, window_bounds = array<i64: 8, 1024>}]} {
    %c0 = arith.constant 0 : index
    %c0_0 = arith.constant 0 : index
    %c0_1 = arith.constant 0 : index
    %c0_2 = arith.constant 0 : index
    %0 = vector.load %arg1[%c0, %c0_0, %c0_1, %c0_2] : memref<8x2x32x256xbf16, #tpu.memory_space<vmem>>, vector<8x1x32x256xbf16>
    %1 = vector.shape_cast %0 : vector<8x1x32x256xbf16> to vector<8x32x256xbf16>
    %2 = vector.shape_cast %1 : vector<8x32x256xbf16> to vector<256x256xbf16>
    %c0_3 = arith.constant 0 : index
    %c1 = arith.constant 1 : index
    %c0_4 = arith.constant 0 : index
    %c0_5 = arith.constant 0 : index
    %3 = vector.load %arg1[%c0_3, %c1, %c0_4, %c0_5] : memref<8x2x32x256xbf16, #tpu.memory_space<vmem>>, vector<8x1x32x256xbf16>
    %4 = vector.shape_cast %3 : vector<8x1x32x256xbf16> to vector<8x32x256xbf16>
    %5 = vector.shape_cast %4 : vector<8x32x256xbf16> to vector<256x256xbf16>
    %c0_6 = arith.constant 0 : index
    %c0_7 = arith.constant 0 : index
    %6 = vector.load %arg2[%c0_6, %c0_7] : memref<256x8xbf16, #tpu.memory_space<vmem>>, vector<256x8xbf16>
    %cst = arith.constant dense<0.000000e+00> : vector<256x8xf32>
    %7 = tpu.matmul %2, %6, %cst {dimension_numbers = #tpu.dot_dimension_numbers<[1], [0], [0], [1], [0, 0, 1, 1], [], []>} : vector<256x256xbf16>, vector<256x8xbf16>, vector<256x8xf32> -> vector<256x8xf32>
    %c0_8 = arith.constant 0 : index
    %c0_9 = arith.constant 0 : index
    %8 = vector.load %arg3[%c0_8, %c0_9] : memref<1x8xf32, #tpu.memory_space<vmem>>, vector<1x8xf32>
    %9 = vector.broadcast %8 : vector<1x8xf32> to vector<256x8xf32>
    %10 = arith.addf %7, %9 : vector<256x8xf32>
    %c0_10 = arith.constant 0 : index
    %c0_11 = arith.constant 0 : index
    %11 = vector.load %arg4[%c0_10, %c0_11] : memref<256x128xbf16, #tpu.memory_space<vmem>>, vector<256x128xbf16>
    %cst_12 = arith.constant dense<0.000000e+00> : vector<256x128xf32>
    %12 = tpu.matmul %5, %11, %cst_12 {dimension_numbers = #tpu.dot_dimension_numbers<[1], [0], [0], [1], [0, 0, 1, 1], [], []>} : vector<256x256xbf16>, vector<256x128xbf16>, vector<256x128xf32> -> vector<256x128xf32>
    %c0_13 = arith.constant 0 : index
    %c0_14 = arith.constant 0 : index
    %13 = vector.load %arg5[%c0_13, %c0_14] : memref<1x128xf32, #tpu.memory_space<vmem>>, vector<1x128xf32>
    %14 = vector.broadcast %13 : vector<1x128xf32> to vector<256x128xf32>
    %15 = arith.addf %12, %14 : vector<256x128xf32>
    %16 = vector.shape_cast %10 : vector<256x8xf32> to vector<8x32x8xf32>
    %cst_15 = arith.constant dense<0xFF800000> : vector<8x8xf32>
    %17 = vector.multi_reduction <maximumf>, %16, %cst_15 [1] : vector<8x32x8xf32> to vector<8x8xf32>
    %18 = vector.shape_cast %17 : vector<8x8xf32> to vector<8x1x8xf32>
    %19 = vector.broadcast %18 : vector<8x1x8xf32> to vector<8x32x8xf32>
    %20 = arith.subf %16, %19 : vector<8x32x8xf32>
    %21 = math.exp %20 : vector<8x32x8xf32>
    %cst_16 = arith.constant dense<0.000000e+00> : vector<8x8xf32>
    %22 = vector.multi_reduction <add>, %21, %cst_16 [1] : vector<8x32x8xf32> to vector<8x8xf32>
    %23 = vector.shape_cast %22 : vector<8x8xf32> to vector<8x1x8xf32>
    %24 = tpu.reciprocal %23 {approx = true} : vector<8x1x8xf32> -> vector<8x1x8xf32>
    %25 = vector.broadcast %24 : vector<8x1x8xf32> to vector<8x32x8xf32>
    %26 = arith.mulf %21, %25 : vector<8x32x8xf32>
    %27 = arith.truncf %26 : vector<8x32x8xf32> to vector<8x32x8xbf16>
    %28 = arith.truncf %15 : vector<256x128xf32> to vector<256x128xbf16>
    %29 = vector.shape_cast %28 : vector<256x128xbf16> to vector<8x32x128xbf16>
    "tpu.trace_start"() <{level = 10 : i32, message = "bth,btc->bhc"}> : () -> ()
    %cst_17 = arith.constant dense<0.000000e+00> : vector<8x8x128xf32>
    %30 = tpu.matmul %27, %29, %cst_17 {dimension_numbers = #tpu.dot_dimension_numbers<[1], [1], [2], [2], [0, 0, 0, 2, 1, 2], [0], [0]>} : vector<8x32x8xbf16>, vector<8x32x128xbf16>, vector<8x8x128xf32> -> vector<8x8x128xf32>
    "tpu.trace_stop"() : () -> ()
    %31 = vector.extract_strided_slice %30 {offsets = [0, 0, 0], sizes = [8, 1, 128], strides = [1, 1, 1]} : vector<8x8x128xf32> to vector<8x1x128xf32>
    %32 = vector.shape_cast %31 : vector<8x1x128xf32> to vector<8x128xf32>
    %c0_18 = arith.constant 0 : index
    %c0_19 = arith.constant 0 : index
    %33 = vector.load %arg6[%c0_18, %c0_19] : memref<8x1024xf32, #tpu.memory_space<vmem>>, vector<8x128xf32>
    tpu.vector_store %arg6[%c0_18, %c0_19], %32 {strides = array<i32>} : memref<8x1024xf32, #tpu.memory_space<vmem>>, vector<8x128xf32>,
    %34 = vector.extract_strided_slice %30 {offsets = [0, 1, 0], sizes = [8, 1, 128], strides = [1, 1, 1]} : vector<8x8x128xf32> to vector<8x1x128xf32>
    %35 = vector.shape_cast %34 : vector<8x1x128xf32> to vector<8x128xf32>
    %c0_20 = arith.constant 0 : index
    %c128 = arith.constant 128 : index
    %36 = vector.load %arg6[%c0_20, %c128] : memref<8x1024xf32, #tpu.memory_space<vmem>>, vector<8x128xf32>
    tpu.vector_store %arg6[%c0_20, %c128], %35 {strides = array<i32>} : memref<8x1024xf32, #tpu.memory_space<vmem>>, vector<8x128xf32>,
    %37 = vector.extract_strided_slice %30 {offsets = [0, 2, 0], sizes = [8, 1, 128], strides = [1, 1, 1]} : vector<8x8x128xf32> to vector<8x1x128xf32>
    %38 = vector.shape_cast %37 : vector<8x1x128xf32> to vector<8x128xf32>
    %c0_21 = arith.constant 0 : index
    %c256 = arith.constant 256 : index
    %39 = vector.load %arg6[%c0_21, %c256] : memref<8x1024xf32, #tpu.memory_space<vmem>>, vector<8x128xf32>
    tpu.vector_store %arg6[%c0_21, %c256], %38 {strides = array<i32>} : memref<8x1024xf32, #tpu.memory_space<vmem>>, vector<8x128xf32>,
    %40 = vector.extract_strided_slice %30 {offsets = [0, 3, 0], sizes = [8, 1, 128], strides = [1, 1, 1]} : vector<8x8x128xf32> to vector<8x1x128xf32>
    %41 = vector.shape_cast %40 : vector<8x1x128xf32> to vector<8x128xf32>
    %c0_22 = arith.constant 0 : index
    %c384 = arith.constant 384 : index
    %42 = vector.load %arg6[%c0_22, %c384] : memref<8x1024xf32, #tpu.memory_space<vmem>>, vector<8x128xf32>
    tpu.vector_store %arg6[%c0_22, %c384], %41 {strides = array<i32>} : memref<8x1024xf32, #tpu.memory_space<vmem>>, vector<8x128xf32>,
    %43 = vector.extract_strided_slice %30 {offsets = [0, 4, 0], sizes = [8, 1, 128], strides = [1, 1, 1]} : vector<8x8x128xf32> to vector<8x1x128xf32>
    %44 = vector.shape_cast %43 : vector<8x1x128xf32> to vector<8x128xf32>
    %c0_23 = arith.constant 0 : index
    %c512 = arith.constant 512 : index
    %45 = vector.load %arg6[%c0_23, %c512] : memref<8x1024xf32, #tpu.memory_space<vmem>>, vector<8x128xf32>
    tpu.vector_store %arg6[%c0_23, %c512], %44 {strides = array<i32>} : memref<8x1024xf32, #tpu.memory_space<vmem>>, vector<8x128xf32>,
    %46 = vector.extract_strided_slice %30 {offsets = [0, 5, 0], sizes = [8, 1, 128], strides = [1, 1, 1]} : vector<8x8x128xf32> to vector<8x1x128xf32>
    %47 = vector.shape_cast %46 : vector<8x1x128xf32> to vector<8x128xf32>
    %c0_24 = arith.constant 0 : index
    %c640 = arith.constant 640 : index
    %48 = vector.load %arg6[%c0_24, %c640] : memref<8x1024xf32, #tpu.memory_space<vmem>>, vector<8x128xf32>
    tpu.vector_store %arg6[%c0_24, %c640], %47 {strides = array<i32>} : memref<8x1024xf32, #tpu.memory_space<vmem>>, vector<8x128xf32>,
    %49 = vector.extract_strided_slice %30 {offsets = [0, 6, 0], sizes = [8, 1, 128], strides = [1, 1, 1]} : vector<8x8x128xf32> to vector<8x1x128xf32>
    %50 = vector.shape_cast %49 : vector<8x1x128xf32> to vector<8x128xf32>
    %c0_25 = arith.constant 0 : index
    %c768 = arith.constant 768 : index
    %51 = vector.load %arg6[%c0_25, %c768] : memref<8x1024xf32, #tpu.memory_space<vmem>>, vector<8x128xf32>
    tpu.vector_store %arg6[%c0_25, %c768], %50 {strides = array<i32>} : memref<8x1024xf32, #tpu.memory_space<vmem>>, vector<8x128xf32>,
    %52 = vector.extract_strided_slice %30 {offsets = [0, 7, 0], sizes = [8, 1, 128], strides = [1, 1, 1]} : vector<8x8x128xf32> to vector<8x1x128xf32>
    %53 = vector.shape_cast %52 : vector<8x1x128xf32> to vector<8x128xf32>
    %c0_26 = arith.constant 0 : index
    %c896 = arith.constant 896 : index
    %54 = vector.load %arg6[%c0_26, %c896] : memref<8x1024xf32, #tpu.memory_space<vmem>>, vector<8x128xf32>
    tpu.vector_store %arg6[%c0_26, %c896], %53 {strides = array<i32>} : memref<8x1024xf32, #tpu.memory_space<vmem>>, vector<8x128xf32>,
    return
  }
  func.func @transform_0(%arg0: i32) -> (i32, i32, i32, i32) {
    %c0_i32 = arith.constant 0 : i32
    %c0_i32_0 = arith.constant 0 : i32
    %c0_i32_1 = arith.constant 0 : i32
    %c0_i32_2 = arith.constant 0 : i32
    return %arg0, %c0_i32, %c0_i32_0, %c0_i32_1 : i32, i32, i32, i32
  }
  func.func @transform_1(%arg0: i32) -> (i32, i32) {
    %c0_i32 = arith.constant 0 : i32
    %c0_i32_0 = arith.constant 0 : i32
    %c0_i32_1 = arith.constant 0 : i32
    return %c0_i32, %c0_i32_0 : i32, i32
  }
  func.func @transform_2(%arg0: i32) -> (i32, i32) {
    %c0_i32 = arith.constant 0 : i32
    %c0_i32_0 = arith.constant 0 : i32
    %c0_i32_1 = arith.constant 0 : i32
    return %c0_i32, %c0_i32_0 : i32, i32
  }
  func.func @transform_3(%arg0: i32) -> (i32, i32) {
    %c0_i32 = arith.constant 0 : i32
    %c0_i32_0 = arith.constant 0 : i32
    %c0_i32_1 = arith.constant 0 : i32
    return %c0_i32, %c0_i32_0 : i32, i32
  }
  func.func @transform_4(%arg0: i32) -> (i32, i32) {
    %c0_i32 = arith.constant 0 : i32
    %c0_i32_0 = arith.constant 0 : i32
    %c0_i32_1 = arith.constant 0 : i32
    return %c0_i32, %c0_i32_0 : i32, i32
  }
  func.func @transform_5(%arg0: i32) -> (i32, i32) {
    %c0_i32 = arith.constant 0 : i32
    %c0_i32_0 = arith.constant 0 : i32
    return %arg0, %c0_i32 : i32, i32
  }
}

</mosaic_0001>

<llo_original>
// kernel: _lambda_.1
$region0: #{_lambda_.1}
  #allocation0 [shape = 'u32[]', space=smem, size = 0x4, offset = 0x4, fixed_abs, tag = 'smem constant byte address 0x4 - core index']
  #allocation1 [shape = 'u32[144,128]{1,0:T(1,128)}', space=vmem, size = 0x12000, scoped, tag = 'internal scratch']
  %s0 = inlined_call_operand.vmem [shape: bf16[16,2,32,256], index: 0, kind: input, shape index: {}]
  %s1 = inlined_call_operand.vmem [shape: bf16[256,8], index: 1, kind: input, shape index: {}]
  %s2 = inlined_call_operand.vmem [shape: f32[1,8], index: 2, kind: input, shape index: {}]
  %s3 = inlined_call_operand.vmem [shape: bf16[256,128], index: 3, kind: input, shape index: {}]
  %s4 = inlined_call_operand.vmem [shape: f32[1,128], index: 4, kind: input, shape index: {}]
  %s5 = inlined_call_operand.vmem [shape: f32[16,1024], index: 5, kind: output, shape index: {}]
  %s6 = sld [smem:[#allocation0]]
  $region53: #{_lambda_.1} parent=0
    _
  %s8 = ssub.s32 1, %s6
  %s9 = scalar_select 0, %s8, %s6
  loop: start=0, step=1, limit=4
  $region2: #{_lambda_.1} parent=0 // loop_pre_header
    _
  $region3: #{_lambda_.1} parent=0 // loop_header
    %s11 = sphi 0, %s15
    %p12 = scmp.ge.s32.totalorder %s11, 4
    %s21 = sphi 0, %s23
    %s24 = sphi 0, %s21
    %s25 = sphi 0, %s24
    %s41 = sphi 0, %s25
    %s45 = sphi 0, %s45
    %s47 = sphi 0, %s45
    %s48 = sphi 0, %s47
    %s62 = sphi 0, %s48
    %s66 = sphi 0, %s66
    %s68 = sphi 0, %s66
    %s69 = sphi 0, %s68
    %s83 = sphi 0, %s69
    %s87 = sphi 0, %s87
    %s89 = sphi 0, %s87
    %s90 = sphi 0, %s89
    %s104 = sphi 0, %s90
    %s108 = sphi 0, %s108
    %s110 = sphi 0, %s108
    %s111 = sphi 0, %s110
    %s125 = sphi 0, %s111
    %s131 = sphi 0, %s133
    %s134 = sphi 0, %s131
    %s135 = sphi 0, %s134
    %s151 = sphi 0, %s135
  $region4: #{_lambda_.1} parent=0 // loop_header_branch
    %14 = sbr.rel (%p12) target = $region8
  $region5: #{_lambda_.1} parent=0 // loop_body
    %s16 = ssub.s32 %s11, 1
    %s17 = ssub.s32 %s11, 2
    %s18 = sadd.s32 %s11, 1
    %s19 = ssub.s32 %s11, %s18
    %p20 = scmp.eq.s32.totalorder %s19, 0
    %s22 = sadd.s32 %s21, 1
    %s23 = scalar_select %p20, %s21, %s22
    %p26 = pneg %p20
    %p27 = scmp.eq.s32.totalorder %s11, 1
    %p28 = por %p26, %p27
    %p29 = scmp.ne.s32.totalorder %s21, %s24
    %p30 = scmp.eq.s32.totalorder %s11, 0
    %p31 = por %p29, %p30
    %p32 = scmp.ne.s32.totalorder %s21, %s24
    %p33 = scmp.eq.s32.totalorder %s16, 1
    %p34 = por %p32, %p33
    %p35 = scmp.ne.s32.totalorder %s24, %s25
    %p36 = scmp.eq.s32.totalorder %s16, 0
    %p37 = por %p35, %p36
    %p38 = scmp.ne.s32.totalorder %s24, %s25
    %p39 = scmp.eq.s32.totalorder %s17, 1
    %p40 = por %p38, %p39
    %p42 = scmp.ne.s32.totalorder %s25, %s41
    %p43 = scmp.eq.s32.totalorder %s17, 0
    %p44 = por %p42, %p43
    %s46 = sadd.s32 %s45, 1
    %p49 = scmp.eq.s32.totalorder %s11, 1
    %p50 = scmp.ne.s32.totalorder %s45, %s47
    %p51 = scmp.eq.s32.totalorder %s11, 0
    %p52 = por %p50, %p51
    %p53 = scmp.ne.s32.totalorder %s45, %s47
    %p54 = scmp.eq.s32.totalorder %s16, 1
    %p55 = por %p53, %p54
    %p56 = scmp.ne.s32.totalorder %s47, %s48
    %p57 = scmp.eq.s32.totalorder %s16, 0
    %p58 = por %p56, %p57
    %p59 = scmp.ne.s32.totalorder %s47, %s48
    %p60 = scmp.eq.s32.totalorder %s17, 1
    %p61 = por %p59, %p60
    %p63 = scmp.ne.s32.totalorder %s48, %s62
    %p64 = scmp.eq.s32.totalorder %s17, 0
    %p65 = por %p63, %p64
    %s67 = sadd.s32 %s66, 1
    %p70 = scmp.eq.s32.totalorder %s11, 1
    %p71 = scmp.ne.s32.totalorder %s66, %s68
    %p72 = scmp.eq.s32.totalorder %s11, 0
    %p73 = por %p71, %p72
    %p74 = scmp.ne.s32.totalorder %s66, %s68
    %p75 = scmp.eq.s32.totalorder %s16, 1
    %p76 = por %p74, %p75
    %p77 = scmp.ne.s32.totalorder %s68, %s69
    %p78 = scmp.eq.s32.totalorder %s16, 0
    %p79 = por %p77, %p78
    %p80 = scmp.ne.s32.totalorder %s68, %s69
    %p81 = scmp.eq.s32.totalorder %s17, 1
    %p82 = por %p80, %p81
    %p84 = scmp.ne.s32.totalorder %s69, %s83
    %p85 = scmp.eq.s32.totalorder %s17, 0
    %p86 = por %p84, %p85
    %s88 = sadd.s32 %s87, 1
    %p91 = scmp.eq.s32.totalorder %s11, 1
    %p92 = scmp.ne.s32.totalorder %s87, %s89
    %p93 = scmp.eq.s32.totalorder %s11, 0
    %p94 = por %p92, %p93
    %p95 = scmp.ne.s32.totalorder %s87, %s89
    %p96 = scmp.eq.s32.totalorder %s16, 1
    %p97 = por %p95, %p96
    %p98 = scmp.ne.s32.totalorder %s89, %s90
    %p99 = scmp.eq.s32.totalorder %s16, 0
    %p100 = por %p98, %p99
    %p101 = scmp.ne.s32.totalorder %s89, %s90
    %p102 = scmp.eq.s32.totalorder %s17, 1
    %p103 = por %p101, %p102
    %p105 = scmp.ne.s32.totalorder %s90, %s104
    %p106 = scmp.eq.s32.totalorder %s17, 0
    %p107 = por %p105, %p106
    %s109 = sadd.s32 %s108, 1
    %p112 = scmp.eq.s32.totalorder %s11, 1
    %p113 = scmp.ne.s32.totalorder %s108, %s110
    %p114 = scmp.eq.s32.totalorder %s11, 0
    %p115 = por %p113, %p114
    %p116 = scmp.ne.s32.totalorder %s108, %s110
    %p117 = scmp.eq.s32.totalorder %s16, 1
    %p118 = por %p116, %p117
    %p119 = scmp.ne.s32.totalorder %s110, %s111
    %p120 = scmp.eq.s32.totalorder %s16, 0
    %p121 = por %p119, %p120
    %p122 = scmp.ne.s32.totalorder %s110, %s111
    %p123 = scmp.eq.s32.totalorder %s17, 1
    %p124 = por %p122, %p123
    %p126 = scmp.ne.s32.totalorder %s111, %s125
    %p127 = scmp.eq.s32.totalorder %s17, 0
    %p128 = por %p126, %p127
    %s129 = ssub.s32 %s11, %s18
    %p130 = scmp.eq.s32.totalorder %s129, 0
    %s132 = sadd.s32 %s131, 1
    %s133 = scalar_select %p130, %s131, %s132
    %p136 = pneg %p130
    %p137 = scmp.eq.s32.totalorder %s11, 1
    %p138 = por %p136, %p137
    %p139 = scmp.ne.s32.totalorder %s131, %s134
    %p140 = scmp.eq.s32.totalorder %s11, 0
    %p141 = por %p139, %p140
    %p142 = scmp.ne.s32.totalorder %s131, %s134
    %p143 = scmp.eq.s32.totalorder %s16, 1
    %p144 = por %p142, %p143
    %p145 = scmp.ne.s32.totalorder %s134, %s135
    %p146 = scmp.eq.s32.totalorder %s16, 0
    %p147 = por %p145, %p146
    %p148 = scmp.ne.s32.totalorder %s134, %s135
    %p149 = scmp.eq.s32.totalorder %s17, 1
    %p150 = por %p148, %p149
    %p152 = scmp.ne.s32.totalorder %s135, %s151
    %p153 = scmp.eq.s32.totalorder %s17, 0
    %p154 = por %p152, %p153
    %p155 = scmp.le.s32.totalorder 1, %s11
    %p156 = scmp.lt.s32.totalorder %s11, 3
    %p157 = pnand %p155, %p156
    %p158 = pneg %p157
    // Predicated region
    $region9: #{_lambda_.1} parent=5 // pred_check
      _
    $region10: #{_lambda_.1} parent=5 // pred_check_branch
      %160 = sbr.rel (%p157) target = $region12
    $region11: #{_lambda_.1} parent=5 // pred_region
      %s161 = ssub.s32 %s11, 1
      // Predicated region
      $region13: #{_lambda_.1} parent=11 // pred_check
        %p162 = pneg %p58
      $region14: #{_lambda_.1} parent=11 // pred_check_branch
        %164 = sbr.rel (%p162) target = $region16
      $region15: #{_lambda_.1} parent=11 // pred_region
        _
      $region16: #{_lambda_.1} parent=11 // pred_fallthru
        _
      // Predicated region
      $region17: #{_lambda_.1} parent=11 // pred_check
        %p165 = pneg %p79
      $region18: #{_lambda_.1} parent=11 // pred_check_branch
        %167 = sbr.rel (%p165) target = $region20
      $region19: #{_lambda_.1} parent=11 // pred_region
        _
      $region20: #{_lambda_.1} parent=11 // pred_fallthru
        _
      // Predicated region
      $region21: #{_lambda_.1} parent=11 // pred_check
        %p168 = pneg %p100
      $region22: #{_lambda_.1} parent=11 // pred_check_branch
        %170 = sbr.rel (%p168) target = $region24
      $region23: #{_lambda_.1} parent=11 // pred_region
        _
      $region24: #{_lambda_.1} parent=11 // pred_fallthru
        _
      // Predicated region
      $region25: #{_lambda_.1} parent=11 // pred_check
        %p171 = pneg %p121
      $region26: #{_lambda_.1} parent=11 // pred_check_branch
        %173 = sbr.rel (%p171) target = $region28
      $region27: #{_lambda_.1} parent=11 // pred_region
        _
      $region28: #{_lambda_.1} parent=11 // pred_fallthru
        _
    $region12: #{_lambda_.1} parent=5 // pred_fallthru
      _
    %p174 = scmp.lt.s32.totalorder %s11, 2
    // Predicated region
    $region29: #{_lambda_.1} parent=5 // pred_check
      %p175 = pneg %p174
    $region30: #{_lambda_.1} parent=5 // pred_check_branch
      %177 = sbr.rel (%p175) target = $region32
    $region31: #{_lambda_.1} parent=5 // pred_region
      // Predicated region
      $region33: #{_lambda_.1} parent=31 // pred_check
        %p178 = pneg %p31
      $region34: #{_lambda_.1} parent=31 // pred_check_branch
        %180 = sbr.rel (%p178) target = $region36
      $region35: #{_lambda_.1} parent=31 // pred_region
        %s181 = smul.u32 8, %s11
        %p182 = scmp.lt.s32.totalorder %s181, 15
        %s183 = scalar_select %p182, %s181, 15
        %s184 = smul.addr %s183, 16
        %s185 = smul.addr %s184, 4
        %s186 = scalar_lea.vmem %s0, %s185
        %s187 = smul.u32 8, %s11
      $region36: #{_lambda_.1} parent=31 // pred_fallthru
        _
    $region32: #{_lambda_.1} parent=5 // pred_fallthru
      _
    %p188 = scmp.le.s32.totalorder 1, %s11
    %p189 = scmp.lt.s32.totalorder %s11, 3
    %p190 = pnand %p188, %p189
    %p191 = pneg %p190
    // Predicated region
    $region37: #{_lambda_.1} parent=5 // pred_check
      _
    $region38: #{_lambda_.1} parent=5 // pred_check_branch
      %193 = sbr.rel (%p190) target = $region40
    $region39: #{_lambda_.1} parent=5 // pred_region
      %s194 = ssub.s32 %s11, 1
      %s195 = smul.u32 8, %s16
      %p196 = scmp.lt.s32.totalorder %s195, 15
      %s197 = scalar_select %p196, %s195, 15
      %s198 = smul.addr %s197, 16
      %s199 = smul.addr %s198, 4
      %s200 = scalar_lea.vmem %s0, %s199
      %p201 = pneg %p37
      %p202 = pneg %p34
      %p203 = pneg %p58
      %p204 = pneg %p55
      %p205 = pneg %p79
      %p206 = pneg %p76
      %p207 = pneg %p100
      %p208 = pneg %p97
      %p209 = pneg %p121
      %p210 = pneg %p118
      %p211 = pneg %p147
      %p212 = pneg %p144
      %p213 = scmp.lt.s32.totalorder %s16, 1
      %s214 = scalar_select %p213, %s16, 1
      %s215 = smul.addr %s214, 8
      %s216 = smul.addr %s215, 8
      %s217 = scalar_lea.vmem %s5, %s216
      %s218 = smul.u32 8, %s16
      %p219 = scmp.lt.s32.totalorder %s218, 15
      %s220 = scalar_select %p219, %s218, 15
      %s221 = smul.addr %s220, 16
      %s222 = smul.addr %s221, 4
      %s223 = scalar_lea.vmem %s0, %s222
      %s224 = smul.u32 8, %s16
      %p225 = scmp.lt.s32.totalorder %s16, 1
      %s226 = scalar_select %p225, %s16, 1
      %s227 = smul.addr %s226, 8
      %s228 = smul.addr %s227, 8
      %s229 = scalar_lea.vmem %s5, %s228
      %v231 = vld [vmem:[%s223] sm:$0xff]
      %v232 = vld [vmem:[%s223 + $0x8] sm:$0xff]
      %v233 = vld [vmem:[%s223 + $0x10] sm:$0xff]
      %v234 = vld [vmem:[%s223 + $0x18] sm:$0xff]
      %v235 = vld [vmem:[%s223 + $0x40] sm:$0xff]
      %v236 = vld [vmem:[%s223 + $0x48] sm:$0xff]
      %v237 = vld [vmem:[%s223 + $0x50] sm:$0xff]
      %v238 = vld [vmem:[%s223 + $0x58] sm:$0xff]
      %v239 = vld [vmem:[%s223 + $0x80] sm:$0xff]
      %v240 = vld [vmem:[%s223 + $0x88] sm:$0xff]
      %v241 = vld [vmem:[%s223 + $0x90] sm:$0xff]
      %v242 = vld [vmem:[%s223 + $0x98] sm:$0xff]
      %v243 = vld [vmem:[%s223 + $0xc0] sm:$0xff]
      %v244 = vld [vmem:[%s223 + $0xc8] sm:$0xff]
      %v245 = vld [vmem:[%s223 + $0xd0] sm:$0xff]
      %v246 = vld [vmem:[%s223 + $0xd8] sm:$0xff]
      %v247 = vld [vmem:[%s223 + $0x100] sm:$0xff]
      %v248 = vld [vmem:[%s223 + $0x108] sm:$0xff]
      %v249 = vld [vmem:[%s223 + $0x110] sm:$0xff]
      %v250 = vld [vmem:[%s223 + $0x118] sm:$0xff]
      %v251 = vld [vmem:[%s223 + $0x140] sm:$0xff]
      %v252 = vld [vmem:[%s223 + $0x148] sm:$0xff]
      %v253 = vld [vmem:[%s223 + $0x150] sm:$0xff]
      %v254 = vld [vmem:[%s223 + $0x158] sm:$0xff]
      %v255 = vld [vmem:[%s223 + $0x180] sm:$0xff]
      %v256 = vld [vmem:[%s223 + $0x188] sm:$0xff]
      %v257 = vld [vmem:[%s223 + $0x190] sm:$0xff]
      %v258 = vld [vmem:[%s223 + $0x198] sm:$0xff]
      %v259 = vld [vmem:[%s223 + $0x1c0] sm:$0xff]
      %v260 = vld [vmem:[%s223 + $0x1c8] sm:$0xff]
      %v261 = vld [vmem:[%s223 + $0x1d0] sm:$0xff]
      %v262 = vld [vmem:[%s223 + $0x1d8] sm:$0xff]
      %s263 = scalar_lea.vmem %s223, 32
      %v264 = vld [vmem:[%s263] sm:$0xff]
      %v265 = vld [vmem:[%s263 + $0x8] sm:$0xff]
      %v266 = vld [vmem:[%s263 + $0x10] sm:$0xff]
      %v267 = vld [vmem:[%s263 + $0x18] sm:$0xff]
      %v268 = vld [vmem:[%s263 + $0x40] sm:$0xff]
      %v269 = vld [vmem:[%s263 + $0x48] sm:$0xff]
      %v270 = vld [vmem:[%s263 + $0x50] sm:$0xff]
      %v271 = vld [vmem:[%s263 + $0x58] sm:$0xff]
      %v272 = vld [vmem:[%s263 + $0x80] sm:$0xff]
      %v273 = vld [vmem:[%s263 + $0x88] sm:$0xff]
      %v274 = vld [vmem:[%s263 + $0x90] sm:$0xff]
      %v275 = vld [vmem:[%s263 + $0x98] sm:$0xff]
      %v276 = vld [vmem:[%s263 + $0xc0] sm:$0xff]
      %v277 = vld [vmem:[%s263 + $0xc8] sm:$0xff]
      %v278 = vld [vmem:[%s263 + $0xd0] sm:$0xff]
      %v279 = vld [vmem:[%s263 + $0xd8] sm:$0xff]
      %v280 = vld [vmem:[%s263 + $0x100] sm:$0xff]
      %v281 = vld [vmem:[%s263 + $0x108] sm:$0xff]
      %v282 = vld [vmem:[%s263 + $0x110] sm:$0xff]
      %v283 = vld [vmem:[%s263 + $0x118] sm:$0xff]
      %v284 = vld [vmem:[%s263 + $0x140] sm:$0xff]
      %v285 = vld [vmem:[%s263 + $0x148] sm:$0xff]
      %v286 = vld [vmem:[%s263 + $0x150] sm:$0xff]
      %v287 = vld [vmem:[%s263 + $0x158] sm:$0xff]
      %v288 = vld [vmem:[%s263 + $0x180] sm:$0xff]
      %v289 = vld [vmem:[%s263 + $0x188] sm:$0xff]
      %v290 = vld [vmem:[%s263 + $0x190] sm:$0xff]
      %v291 = vld [vmem:[%s263 + $0x198] sm:$0xff]
      %v292 = vld [vmem:[%s263 + $0x1c0] sm:$0xff]
      %v293 = vld [vmem:[%s263 + $0x1c8] sm:$0xff]
      %v294 = vld [vmem:[%s263 + $0x1d0] sm:$0xff]
      %v295 = vld [vmem:[%s263 + $0x1d8] sm:$0xff]
      %v296 = vld [vmem:[%s1] sm:$0xf]
      %v297 = vld [vmem:[%s1 + $0x4] sm:$0xf]
      %v298 = vld [vmem:[%s1 + $0x8] sm:$0xf]
      %v299 = vld [vmem:[%s1 + $0xc] sm:$0xf]
      %v300 = vld [vmem:[%s1 + $0x10] sm:$0xf]
      %v301 = vld [vmem:[%s1 + $0x14] sm:$0xf]
      %v302 = vld [vmem:[%s1 + $0x18] sm:$0xf]
      %v303 = vld [vmem:[%s1 + $0x1c] sm:$0xf]
      %v304 = vld [vmem:[%s1 + $0x20] sm:$0xf]
      %v305 = vld [vmem:[%s1 + $0x24] sm:$0xf]
      %v306 = vld [vmem:[%s1 + $0x28] sm:$0xf]
      %v307 = vld [vmem:[%s1 + $0x2c] sm:$0xf]
      %v308 = vld [vmem:[%s1 + $0x30] sm:$0xf]
      %v309 = vld [vmem:[%s1 + $0x34] sm:$0xf]
      %v310 = vld [vmem:[%s1 + $0x38] sm:$0xf]
      %v311 = vld [vmem:[%s1 + $0x3c] sm:$0xf]
      %v312 = vld [vmem:[%s1 + $0x40] sm:$0xf]
      %v313 = vld [vmem:[%s1 + $0x44] sm:$0xf]
      %v314 = vld [vmem:[%s1 + $0x48] sm:$0xf]
      %v315 = vld [vmem:[%s1 + $0x4c] sm:$0xf]
      %v316 = vld [vmem:[%s1 + $0x50] sm:$0xf]
      %v317 = vld [vmem:[%s1 + $0x54] sm:$0xf]
      %v318 = vld [vmem:[%s1 + $0x58] sm:$0xf]
      %v319 = vld [vmem:[%s1 + $0x5c] sm:$0xf]
      %v320 = vld [vmem:[%s1 + $0x60] sm:$0xf]
      %v321 = vld [vmem:[%s1 + $0x64] sm:$0xf]
      %v322 = vld [vmem:[%s1 + $0x68] sm:$0xf]
      %v323 = vld [vmem:[%s1 + $0x6c] sm:$0xf]
      %v324 = vld [vmem:[%s1 + $0x70] sm:$0xf]
      %v325 = vld [vmem:[%s1 + $0x74] sm:$0xf]
      %v326 = vld [vmem:[%s1 + $0x78] sm:$0xf]
      %v327 = vld [vmem:[%s1 + $0x7c] sm:$0xf]
      %v328 = vld [vmem:[%s2] sm:$0x1]
      %v330 = vlaneseq
      %v331 = vshrl.u32 %v330, 7
      %v332 = vsub.s32 0, %v331
      %v333 = vrot.slane %v328, %v332
      %v367 = vunpack.c.l.b16 %v231
      %v368 = vunpack.c.h.b16 %v231
      %v369 = vunpack.c.l.b16 %v232
      %v370 = vunpack.c.h.b16 %v232
      %v371 = vunpack.c.l.b16 %v233
      %v372 = vunpack.c.h.b16 %v233
      %v373 = vunpack.c.l.b16 %v234
      %v374 = vunpack.c.h.b16 %v234
      %v375 = vunpack.c.l.b16 %v235
      %v376 = vunpack.c.h.b16 %v235
      %v377 = vunpack.c.l.b16 %v236
      %v378 = vunpack.c.h.b16 %v236
      %v379 = vunpack.c.l.b16 %v237
      %v380 = vunpack.c.h.b16 %v237
      %v381 = vunpack.c.l.b16 %v238
      %v382 = vunpack.c.h.b16 %v238
      %v383 = vunpack.c.l.b16 %v239
      %v384 = vunpack.c.h.b16 %v239
      %v385 = vunpack.c.l.b16 %v240
      %v386 = vunpack.c.h.b16 %v240
      %v387 = vunpack.c.l.b16 %v241
      %v388 = vunpack.c.h.b16 %v241
      %v389 = vunpack.c.l.b16 %v242
      %v390 = vunpack.c.h.b16 %v242
      %v391 = vunpack.c.l.b16 %v243
      %v392 = vunpack.c.h.b16 %v243
      %v393 = vunpack.c.l.b16 %v244
      %v394 = vunpack.c.h.b16 %v244
      %v395 = vunpack.c.l.b16 %v245
      %v396 = vunpack.c.h.b16 %v245
      %v397 = vunpack.c.l.b16 %v246
      %v398 = vunpack.c.h.b16 %v246
      %v399 = vunpack.c.l.b16 %v247
      %v400 = vunpack.c.h.b16 %v247
      %v401 = vunpack.c.l.b16 %v248
      %v402 = vunpack.c.h.b16 %v248
      %v403 = vunpack.c.l.b16 %v249
      %v404 = vunpack.c.h.b16 %v249
      %v405 = vunpack.c.l.b16 %v250
      %v406 = vunpack.c.h.b16 %v250
      %v407 = vunpack.c.l.b16 %v251
      %v408 = vunpack.c.h.b16 %v251
      %v409 = vunpack.c.l.b16 %v252
      %v410 = vunpack.c.h.b16 %v252
      %v411 = vunpack.c.l.b16 %v253
      %v412 = vunpack.c.h.b16 %v253
      %v413 = vunpack.c.l.b16 %v254
      %v414 = vunpack.c.h.b16 %v254
      %v415 = vunpack.c.l.b16 %v255
      %v416 = vunpack.c.h.b16 %v255
      %v417 = vunpack.c.l.b16 %v256
      %v418 = vunpack.c.h.b16 %v256
      %v419 = vunpack.c.l.b16 %v257
      %v420 = vunpack.c.h.b16 %v257
      %v421 = vunpack.c.l.b16 %v258
      %v422 = vunpack.c.h.b16 %v258
      %v423 = vunpack.c.l.b16 %v259
      %v424 = vunpack.c.h.b16 %v259
      %v425 = vunpack.c.l.b16 %v260
      %v426 = vunpack.c.h.b16 %v260
      %v427 = vunpack.c.l.b16 %v261
      %v428 = vunpack.c.h.b16 %v261
      %v429 = vunpack.c.l.b16 %v262
      %v430 = vunpack.c.h.b16 %v262
      %v431 = vpack.c.b16 %v369, %v367
      %v432 = vpack.c.b16 %v370, %v368
      %v433 = vpack.c.b16 %v373, %v371
      %v434 = vpack.c.b16 %v374, %v372
      %v435 = vpack.c.b16 %v377, %v375
      %v436 = vpack.c.b16 %v378, %v376
      %v437 = vpack.c.b16 %v381, %v379
      %v438 = vpack.c.b16 %v382, %v380
      %v439 = vpack.c.b16 %v385, %v383
      %v440 = vpack.c.b16 %v386, %v384
      %v441 = vpack.c.b16 %v389, %v387
      %v442 = vpack.c.b16 %v390, %v388
      %v443 = vpack.c.b16 %v393, %v391
      %v444 = vpack.c.b16 %v394, %v392
      %v445 = vpack.c.b16 %v397, %v395
      %v446 = vpack.c.b16 %v398, %v396
      %v447 = vpack.c.b16 %v401, %v399
      %v448 = vpack.c.b16 %v402, %v400
      %v449 = vpack.c.b16 %v405, %v403
      %v450 = vpack.c.b16 %v406, %v404
      %v451 = vpack.c.b16 %v409, %v407
      %v452 = vpack.c.b16 %v410, %v408
      %v453 = vpack.c.b16 %v413, %v411
      %v454 = vpack.c.b16 %v414, %v412
      %v455 = vpack.c.b16 %v417, %v415
      %v456 = vpack.c.b16 %v418, %v416
      %v457 = vpack.c.b16 %v421, %v419
      %v458 = vpack.c.b16 %v422, %v420
      %v459 = vpack.c.b16 %v425, %v423
      %v460 = vpack.c.b16 %v426, %v424
      %v461 = vpack.c.b16 %v429, %v427
      %v462 = vpack.c.b16 %v430, %v428
      %v527 = vunpack.c.l.b16 %v296
      %v528 = vunpack.c.l.b16 %v297
      %v529 = vunpack.c.l.b16 %v298
      %v530 = vunpack.c.l.b16 %v299
      %v531 = vunpack.c.l.b16 %v300
      %v532 = vunpack.c.l.b16 %v301
      %v533 = vunpack.c.l.b16 %v302
      %v534 = vunpack.c.l.b16 %v303
      %v535 = vunpack.c.l.b16 %v304
      %v536 = vunpack.c.l.b16 %v305
      %v537 = vunpack.c.l.b16 %v306
      %v538 = vunpack.c.l.b16 %v307
      %v539 = vunpack.c.l.b16 %v308
      %v540 = vunpack.c.l.b16 %v309
      %v541 = vunpack.c.l.b16 %v310
      %v542 = vunpack.c.l.b16 %v311
      %v543 = vunpack.c.l.b16 %v312
      %v544 = vunpack.c.l.b16 %v313
      %v545 = vunpack.c.l.b16 %v314
      %v546 = vunpack.c.l.b16 %v315
      %v547 = vunpack.c.l.b16 %v316
      %v548 = vunpack.c.l.b16 %v317
      %v549 = vunpack.c.l.b16 %v318
      %v550 = vunpack.c.l.b16 %v319
      %v551 = vunpack.c.l.b16 %v320
      %v552 = vunpack.c.l.b16 %v321
      %v553 = vunpack.c.l.b16 %v322
      %v554 = vunpack.c.l.b16 %v323
      %v555 = vunpack.c.l.b16 %v324
      %v556 = vunpack.c.l.b16 %v325
      %v557 = vunpack.c.l.b16 %v326
      %v558 = vunpack.c.l.b16 %v327
      %v559 = vpack.c.b16 %v528, %v527
      %v560 = vpack.c.b16 %v530, %v529
      %v561 = vpack.c.b16 %v532, %v531
      %v562 = vpack.c.b16 %v534, %v533
      %v563 = vpack.c.b16 %v536, %v535
      %v564 = vpack.c.b16 %v538, %v537
      %v565 = vpack.c.b16 %v540, %v539
      %v566 = vpack.c.b16 %v542, %v541
      %v567 = vpack.c.b16 %v544, %v543
      %v568 = vpack.c.b16 %v546, %v545
      %v569 = vpack.c.b16 %v548, %v547
      %v570 = vpack.c.b16 %v550, %v549
      %v571 = vpack.c.b16 %v552, %v551
      %v572 = vpack.c.b16 %v554, %v553
      %v573 = vpack.c.b16 %v556, %v555
      %v574 = vpack.c.b16 %v558, %v557
      %591 = vmatprep.subr.bf16.mxu0 0
      %592 = vmatpush1.bf16.msra.mxu0 %v559
      %593 = vmatprep.subr.bf16.mxu0 0
      %594 = vmatpush1.bf16.msra.mxu0 %v560
      %595 = vmatprep.subr.bf16.mxu0 0
      %596 = vmatpush1.bf16.msra.mxu0 %v561
      %597 = vmatprep.subr.bf16.mxu0 0
      %598 = vmatpush1.bf16.msra.mxu0 %v562
      %599 = vmatprep.subr.bf16.mxu0 0
      %600 = vmatpush1.bf16.msra.mxu0 %v563
      %601 = vmatprep.subr.bf16.mxu0 0
      %602 = vmatpush1.bf16.msra.mxu0 %v564
      %603 = vmatprep.subr.bf16.mxu0 0
      %604 = vmatpush1.bf16.msra.mxu0 %v565
      %605 = vmatprep.subr.bf16.mxu0 0
      %606 = vmatpush1.bf16.msra.mxu0 %v566
      %607 = vmatprep.subr.bf16.mxu0 0
      %608 = vmatpush1.bf16.msra.mxu0 %v567
      %609 = vmatprep.subr.bf16.mxu0 0
      %610 = vmatpush1.bf16.msra.mxu0 %v568
      %611 = vmatprep.subr.bf16.mxu0 0
      %612 = vmatpush1.bf16.msra.mxu0 %v569
      %613 = vmatprep.subr.bf16.mxu0 0
      %614 = vmatpush1.bf16.msra.mxu0 %v570
      %615 = vmatprep.subr.bf16.mxu0 0
      %616 = vmatpush1.bf16.msra.mxu0 %v571
      %617 = vmatprep.subr.bf16.mxu0 0
      %618 = vmatpush1.bf16.msra.mxu0 %v572
      %619 = vmatprep.subr.bf16.mxu0 0
      %620 = vmatpush1.bf16.msra.mxu0 %v573
      %621 = vmatprep.subr.bf16.mxu0 0
      %622 = vmatpush1.bf16.msra.mxu0 %v574
      %623 = vmatprep.mubr.bf16.mxu0 %v432
      %624 = vmatmul.mubr.bf16.gmra.mrb[0].mxu0 %v431
      %v625 = vpop.f32.mrb[0].mxu0
      %v626 = vadd.f32 %v333, %v625
      %v627 = vpop.f32.mrb[0].mxu0
      %v628 = vpop.f32.mrb[0].mxu0
      %v629 = vadd.f32 %v333, %v628
      %v630 = vpop.f32.mrb[0].mxu0
      %631 = vmatprep.mubr.bf16.mxu0 %v434
      %632 = vmatmul.mubr.bf16.gmra.mrb[0].mxu0 %v433
      %v633 = vpop.f32.mrb[0].mxu0
      %v634 = vadd.f32 %v333, %v633
      %v635 = vpop.f32.mrb[0].mxu0
      %v636 = vpop.f32.mrb[0].mxu0
      %v637 = vadd.f32 %v333, %v636
      %v638 = vpop.f32.mrb[0].mxu0
      %639 = vmatprep.mubr.bf16.mxu0 %v436
      %640 = vmatmul.mubr.bf16.gmra.mrb[0].mxu0 %v435
      %v641 = vpop.f32.mrb[0].mxu0
      %v642 = vadd.f32 %v333, %v641
      %v643 = vpop.f32.mrb[0].mxu0
      %v644 = vpop.f32.mrb[0].mxu0
      %v645 = vadd.f32 %v333, %v644
      %v646 = vpop.f32.mrb[0].mxu0
      %647 = vmatprep.mubr.bf16.mxu0 %v438
      %648 = vmatmul.mubr.bf16.gmra.mrb[0].mxu0 %v437
      %v649 = vpop.f32.mrb[0].mxu0
      %v650 = vadd.f32 %v333, %v649
      %v651 = vpop.f32.mrb[0].mxu0
      %v652 = vpop.f32.mrb[0].mxu0
      %v653 = vadd.f32 %v333, %v652
      %v654 = vpop.f32.mrb[0].mxu0
      %655 = vmatprep.mubr.bf16.mxu0 %v440
      %656 = vmatmul.mubr.bf16.gmra.mrb[0].mxu0 %v439
      %v657 = vpop.f32.mrb[0].mxu0
      %v658 = vadd.f32 %v333, %v657
      %v659 = vpop.f32.mrb[0].mxu0
      %v660 = vpop.f32.mrb[0].mxu0
      %v661 = vadd.f32 %v333, %v660
      %v662 = vpop.f32.mrb[0].mxu0
      %663 = vmatprep.mubr.bf16.mxu0 %v442
      %664 = vmatmul.mubr.bf16.gmra.mrb[0].mxu0 %v441
      %v665 = vpop.f32.mrb[0].mxu0
      %v666 = vadd.f32 %v333, %v665
      %v667 = vpop.f32.mrb[0].mxu0
      %v668 = vpop.f32.mrb[0].mxu0
      %v669 = vadd.f32 %v333, %v668
      %v670 = vpop.f32.mrb[0].mxu0
      %671 = vmatprep.mubr.bf16.mxu0 %v444
      %672 = vmatmul.mubr.bf16.gmra.mrb[0].mxu0 %v443
      %v673 = vpop.f32.mrb[0].mxu0
      %v674 = vadd.f32 %v333, %v673
      %v675 = vpop.f32.mrb[0].mxu0
      %v676 = vpop.f32.mrb[0].mxu0
      %v677 = vadd.f32 %v333, %v676
      %v678 = vpop.f32.mrb[0].mxu0
      %679 = vmatprep.mubr.bf16.mxu0 %v446
      %680 = vmatmul.mubr.bf16.gmra.mrb[0].mxu0 %v445
      %v681 = vpop.f32.mrb[0].mxu0
      %v682 = vadd.f32 %v333, %v681
      %v683 = vpop.f32.mrb[0].mxu0
      %v684 = vpop.f32.mrb[0].mxu0
      %v685 = vadd.f32 %v333, %v684
      %v686 = vpop.f32.mrb[0].mxu0
      %687 = vmatprep.mubr.bf16.mxu0 %v448
      %688 = vmatmul.mubr.bf16.gmra.mrb[0].mxu0 %v447
      %v689 = vpop.f32.mrb[0].mxu0
      %v690 = vadd.f32 %v333, %v689
      %v691 = vpop.f32.mrb[0].mxu0
      %v692 = vpop.f32.mrb[0].mxu0
      %v693 = vadd.f32 %v333, %v692
      %v694 = vpop.f32.mrb[0].mxu0
      %695 = vmatprep.mubr.bf16.mxu0 %v450
      %696 = vmatmul.mubr.bf16.gmra.mrb[0].mxu0 %v449
      %v697 = vpop.f32.mrb[0].mxu0
      %v698 = vadd.f32 %v333, %v697
      %v699 = vpop.f32.mrb[0].mxu0
      %v700 = vpop.f32.mrb[0].mxu0
      %v701 = vadd.f32 %v333, %v700
      %v702 = vpop.f32.mrb[0].mxu0
      %703 = vmatprep.mubr.bf16.mxu0 %v452
      %704 = vmatmul.mubr.bf16.gmra.mrb[0].mxu0 %v451
      %v705 = vpop.f32.mrb[0].mxu0
      %v706 = vadd.f32 %v333, %v705
      %v707 = vpop.f32.mrb[0].mxu0
      %v708 = vpop.f32.mrb[0].mxu0
      %v709 = vadd.f32 %v333, %v708
      %v710 = vpop.f32.mrb[0].mxu0
      %711 = vmatprep.mubr.bf16.mxu0 %v454
      %712 = vmatmul.mubr.bf16.gmra.mrb[0].mxu0 %v453
      %v713 = vpop.f32.mrb[0].mxu0
      %v714 = vadd.f32 %v333, %v713
      %v715 = vpop.f32.mrb[0].mxu0
      %v716 = vpop.f32.mrb[0].mxu0
      %v717 = vadd.f32 %v333, %v716
      %v718 = vpop.f32.mrb[0].mxu0
      %719 = vmatprep.mubr.bf16.mxu0 %v456
      %720 = vmatmul.mubr.bf16.gmra.mrb[0].mxu0 %v455
      %v721 = vpop.f32.mrb[0].mxu0
      %v722 = vadd.f32 %v333, %v721
      %v723 = vpop.f32.mrb[0].mxu0
      %v724 = vpop.f32.mrb[0].mxu0
      %v725 = vadd.f32 %v333, %v724
      %v726 = vpop.f32.mrb[0].mxu0
      %727 = vmatprep.mubr.bf16.mxu0 %v458
      %728 = vmatmul.mubr.bf16.gmra.mrb[0].mxu0 %v457
      %v729 = vpop.f32.mrb[0].mxu0
      %v730 = vadd.f32 %v333, %v729
      %v731 = vpop.f32.mrb[0].mxu0
      %v732 = vpop.f32.mrb[0].mxu0
      %v733 = vadd.f32 %v333, %v732
      %v734 = vpop.f32.mrb[0].mxu0
      %735 = vmatprep.mubr.bf16.mxu0 %v460
      %736 = vmatmul.mubr.bf16.gmra.mrb[0].mxu0 %v459
      %v737 = vpop.f32.mrb[0].mxu0
      %v738 = vadd.f32 %v333, %v737
      %v739 = vpop.f32.mrb[0].mxu0
      %v740 = vpop.f32.mrb[0].mxu0
      %v741 = vadd.f32 %v333, %v740
      %v742 = vpop.f32.mrb[0].mxu0
      %743 = vmatprep.mubr.bf16.mxu0 %v462
      %744 = vmatmul.mubr.bf16.gmra.mrb[0].mxu0 %v461
      %v745 = vpop.f32.mrb[0].mxu0
      %v746 = vadd.f32 %v333, %v745
      %v747 = vpop.f32.mrb[0].mxu0
      %v748 = vpop.f32.mrb[0].mxu0
      %v749 = vadd.f32 %v333, %v748
      %v750 = vpop.f32.mrb[0].mxu0
      %751 = vdwg.mxu0
      %v752 = vld [vmem:[%s3] sm:$0xf]
      %v753 = vld [vmem:[%s3 + $0x4] sm:$0xf]
      %v754 = vld [vmem:[%s3 + $0x8] sm:$0xf]
      %v755 = vld [vmem:[%s3 + $0xc] sm:$0xf]
      %v756 = vld [vmem:[%s3 + $0x10] sm:$0xf]
      %v757 = vld [vmem:[%s3 + $0x14] sm:$0xf]
      %v758 = vld [vmem:[%s3 + $0x18] sm:$0xf]
      %v759 = vld [vmem:[%s3 + $0x1c] sm:$0xf]
      %v760 = vld [vmem:[%s3 + $0x20] sm:$0xf]
      %v761 = vld [vmem:[%s3 + $0x24] sm:$0xf]
      %v762 = vld [vmem:[%s3 + $0x28] sm:$0xf]
      %v763 = vld [vmem:[%s3 + $0x2c] sm:$0xf]
      %v764 = vld [vmem:[%s3 + $0x30] sm:$0xf]
      %v765 = vld [vmem:[%s3 + $0x34] sm:$0xf]
      %v766 = vld [vmem:[%s3 + $0x38] sm:$0xf]
      %v767 = vld [vmem:[%s3 + $0x3c] sm:$0xf]
      %v768 = vld [vmem:[%s3 + $0x40] sm:$0xf]
      %v769 = vld [vmem:[%s3 + $0x44] sm:$0xf]
      %v770 = vld [vmem:[%s3 + $0x48] sm:$0xf]
      %v771 = vld [vmem:[%s3 + $0x4c] sm:$0xf]
      %v772 = vld [vmem:[%s3 + $0x50] sm:$0xf]
      %v773 = vld [vmem:[%s3 + $0x54] sm:$0xf]
      %v774 = vld [vmem:[%s3 + $0x58] sm:$0xf]
      %v775 = vld [vmem:[%s3 + $0x5c] sm:$0xf]
      %v776 = vld [vmem:[%s3 + $0x60] sm:$0xf]
      %v777 = vld [vmem:[%s3 + $0x64] sm:$0xf]
      %v778 = vld [vmem:[%s3 + $0x68] sm:$0xf]
      %v779 = vld [vmem:[%s3 + $0x6c] sm:$0xf]
      %v780 = vld [vmem:[%s3 + $0x70] sm:$0xf]
      %v781 = vld [vmem:[%s3 + $0x74] sm:$0xf]
      %v782 = vld [vmem:[%s3 + $0x78] sm:$0xf]
      %v783 = vld [vmem:[%s3 + $0x7c] sm:$0xf]
      %v784 = vld [vmem:[%s4] sm:$0x1]
      %v786 = vlaneseq
      %v787 = vshrl.u32 %v786, 7
      %v788 = vsub.s32 0, %v787
      %v789 = vrot.slane %v784, %v788
      %v823 = vunpack.c.l.b16 %v264
      %v824 = vunpack.c.h.b16 %v264
      %v825 = vunpack.c.l.b16 %v265
      %v826 = vunpack.c.h.b16 %v265
      %v827 = vunpack.c.l.b16 %v266
      %v828 = vunpack.c.h.b16 %v266
      %v829 = vunpack.c.l.b16 %v267
      %v830 = vunpack.c.h.b16 %v267
      %v831 = vunpack.c.l.b16 %v268
      %v832 = vunpack.c.h.b16 %v268
      %v833 = vunpack.c.l.b16 %v269
      %v834 = vunpack.c.h.b16 %v269
      %v835 = vunpack.c.l.b16 %v270
      %v836 = vunpack.c.h.b16 %v270
      %v837 = vunpack.c.l.b16 %v271
      %v838 = vunpack.c.h.b16 %v271
      %v839 = vunpack.c.l.b16 %v272
      %v840 = vunpack.c.h.b16 %v272
      %v841 = vunpack.c.l.b16 %v273
      %v842 = vunpack.c.h.b16 %v273
      %v843 = vunpack.c.l.b16 %v274
      %v844 = vunpack.c.h.b16 %v274
      %v845 = vunpack.c.l.b16 %v275
      %v846 = vunpack.c.h.b16 %v275
      %v847 = vunpack.c.l.b16 %v276
      %v848 = vunpack.c.h.b16 %v276
      %v849 = vunpack.c.l.b16 %v277
      %v850 = vunpack.c.h.b16 %v277
      %v851 = vunpack.c.l.b16 %v278
      %v852 = vunpack.c.h.b16 %v278
      %v853 = vunpack.c.l.b16 %v279
      %v854 = vunpack.c.h.b16 %v279
      %v855 = vunpack.c.l.b16 %v280
      %v856 = vunpack.c.h.b16 %v280
      %v857 = vunpack.c.l.b16 %v281
      %v858 = vunpack.c.h.b16 %v281
      %v859 = vunpack.c.l.b16 %v282
      %v860 = vunpack.c.h.b16 %v282
      %v861 = vunpack.c.l.b16 %v283
      %v862 = vunpack.c.h.b16 %v283
      %v863 = vunpack.c.l.b16 %v284
      %v864 = vunpack.c.h.b16 %v284
      %v865 = vunpack.c.l.b16 %v285
      %v866 = vunpack.c.h.b16 %v285
      %v867 = vunpack.c.l.b16 %v286
      %v868 = vunpack.c.h.b16 %v286
      %v869 = vunpack.c.l.b16 %v287
      %v870 = vunpack.c.h.b16 %v287
      %v871 = vunpack.c.l.b16 %v288
      %v872 = vunpack.c.h.b16 %v288
      %v873 = vunpack.c.l.b16 %v289
      %v874 = vunpack.c.h.b16 %v289
      %v875 = vunpack.c.l.b16 %v290
      %v876 = vunpack.c.h.b16 %v290
      %v877 = vunpack.c.l.b16 %v291
      %v878 = vunpack.c.h.b16 %v291
      %v879 = vunpack.c.l.b16 %v292
      %v880 = vunpack.c.h.b16 %v292
      %v881 = vunpack.c.l.b16 %v293
      %v882 = vunpack.c.h.b16 %v293
      %v883 = vunpack.c.l.b16 %v294
      %v884 = vunpack.c.h.b16 %v294
      %v885 = vunpack.c.l.b16 %v295
      %v886 = vunpack.c.h.b16 %v295
      %v887 = vpack.c.b16 %v825, %v823
      %v888 = vpack.c.b16 %v826, %v824
      %v889 = vpack.c.b16 %v829, %v827
      %v890 = vpack.c.b16 %v830, %v828
      %v891 = vpack.c.b16 %v833, %v831
      %v892 = vpack.c.b16 %v834, %v832
      %v893 = vpack.c.b16 %v837, %v835
      %v894 = vpack.c.b16 %v838, %v836
      %v895 = vpack.c.b16 %v841, %v839
      %v896 = vpack.c.b16 %v842, %v840
      %v897 = vpack.c.b16 %v845, %v843
      %v898 = vpack.c.b16 %v846, %v844
      %v899 = vpack.c.b16 %v849, %v847
      %v900 = vpack.c.b16 %v850, %v848
      %v901 = vpack.c.b16 %v853, %v851
      %v902 = vpack.c.b16 %v854, %v852
      %v903 = vpack.c.b16 %v857, %v855
      %v904 = vpack.c.b16 %v858, %v856
      %v905 = vpack.c.b16 %v861, %v859
      %v906 = vpack.c.b16 %v862, %v860
      %v907 = vpack.c.b16 %v865, %v863
      %v908 = vpack.c.b16 %v866, %v864
      %v909 = vpack.c.b16 %v869, %v867
      %v910 = vpack.c.b16 %v870, %v868
      %v911 = vpack.c.b16 %v873, %v871
      %v912 = vpack.c.b16 %v874, %v872
      %v913 = vpack.c.b16 %v877, %v875
      %v914 = vpack.c.b16 %v878, %v876
      %v915 = vpack.c.b16 %v881, %v879
      %v916 = vpack.c.b16 %v882, %v880
      %v917 = vpack.c.b16 %v885, %v883
      %v918 = vpack.c.b16 %v886, %v884
      %v983 = vunpack.c.l.b16 %v752
      %v984 = vunpack.c.l.b16 %v753
      %v985 = vunpack.c.l.b16 %v754
      %v986 = vunpack.c.l.b16 %v755
      %v987 = vunpack.c.l.b16 %v756
      %v988 = vunpack.c.l.b16 %v757
      %v989 = vunpack.c.l.b16 %v758
      %v990 = vunpack.c.l.b16 %v759
      %v991 = vunpack.c.l.b16 %v760
      %v992 = vunpack.c.l.b16 %v761
      %v993 = vunpack.c.l.b16 %v762
      %v994 = vunpack.c.l.b16 %v763
      %v995 = vunpack.c.l.b16 %v764
      %v996 = vunpack.c.l.b16 %v765
      %v997 = vunpack.c.l.b16 %v766
      %v998 = vunpack.c.l.b16 %v767
      %v999 = vunpack.c.l.b16 %v768
      %v1000 = vunpack.c.l.b16 %v769
      %v1001 = vunpack.c.l.b16 %v770
      %v1002 = vunpack.c.l.b16 %v771
      %v1003 = vunpack.c.l.b16 %v772
      %v1004 = vunpack.c.l.b16 %v773
      %v1005 = vunpack.c.l.b16 %v774
      %v1006 = vunpack.c.l.b16 %v775
      %v1007 = vunpack.c.l.b16 %v776
      %v1008 = vunpack.c.l.b16 %v777
      %v1009 = vunpack.c.l.b16 %v778
      %v1010 = vunpack.c.l.b16 %v779
      %v1011 = vunpack.c.l.b16 %v780
      %v1012 = vunpack.c.l.b16 %v781
      %v1013 = vunpack.c.l.b16 %v782
      %v1014 = vunpack.c.l.b16 %v783
      %v1015 = vpack.c.b16 %v984, %v983
      %v1016 = vpack.c.b16 %v986, %v985
      %v1017 = vpack.c.b16 %v988, %v987
      %v1018 = vpack.c.b16 %v990, %v989
      %v1019 = vpack.c.b16 %v992, %v991
      %v1020 = vpack.c.b16 %v994, %v993
      %v1021 = vpack.c.b16 %v996, %v995
      %v1022 = vpack.c.b16 %v998, %v997
      %v1023 = vpack.c.b16 %v1000, %v999
      %v1024 = vpack.c.b16 %v1002, %v1001
      %v1025 = vpack.c.b16 %v1004, %v1003
      %v1026 = vpack.c.b16 %v1006, %v1005
      %v1027 = vpack.c.b16 %v1008, %v1007
      %v1028 = vpack.c.b16 %v1010, %v1009
      %v1029 = vpack.c.b16 %v1012, %v1011
      %v1030 = vpack.c.b16 %v1014, %v1013
      %1047 = vmatprep.subr.bf16.mxu0 0
      %1048 = vmatpush1.bf16.msra.mxu0 %v1015
      %1049 = vmatprep.subr.bf16.mxu0 0
      %1050 = vmatpush1.bf16.msra.mxu0 %v1016
      %1051 = vmatprep.subr.bf16.mxu0 0
      %1052 = vmatpush1.bf16.msra.mxu0 %v1017
      %1053 = vmatprep.subr.bf16.mxu0 0
      %1054 = vmatpush1.bf16.msra.mxu0 %v1018
      %1055 = vmatprep.subr.bf16.mxu0 0
      %1056 = vmatpush1.bf16.msra.mxu0 %v1019
      %1057 = vmatprep.subr.bf16.mxu0 0
      %1058 = vmatpush1.bf16.msra.mxu0 %v1020
      %1059 = vmatprep.subr.bf16.mxu0 0
      %1060 = vmatpush1.bf16.msra.mxu0 %v1021
      %1061 = vmatprep.subr.bf16.mxu0 0
      %1062 = vmatpush1.bf16.msra.mxu0 %v1022
      %1063 = vmatprep.subr.bf16.mxu0 0
      %1064 = vmatpush1.bf16.msra.mxu0 %v1023
      %1065 = vmatprep.subr.bf16.mxu0 0
      %1066 = vmatpush1.bf16.msra.mxu0 %v1024
      %1067 = vmatprep.subr.bf16.mxu0 0
      %1068 = vmatpush1.bf16.msra.mxu0 %v1025
      %1069 = vmatprep.subr.bf16.mxu0 0
      %1070 = vmatpush1.bf16.msra.mxu0 %v1026
      %1071 = vmatprep.subr.bf16.mxu0 0
      %1072 = vmatpush1.bf16.msra.mxu0 %v1027
      %1073 = vmatprep.subr.bf16.mxu0 0
      %1074 = vmatpush1.bf16.msra.mxu0 %v1028
      %1075 = vmatprep.subr.bf16.mxu0 0
      %1076 = vmatpush1.bf16.msra.mxu0 %v1029
      %1077 = vmatprep.subr.bf16.mxu0 0
      %1078 = vmatpush1.bf16.msra.mxu0 %v1030
      %1079 = vmatprep.mubr.bf16.mxu0 %v888
      %1080 = vmatmul.mubr.bf16.gmra.mrb[0].mxu0 %v887
      %v1081 = vpop.f32.mrb[0].mxu0
      %v1082 = vadd.f32 %v789, %v1081
      %v1083 = vpop.f32.mrb[0].mxu0
      %v1084 = vpop.f32.mrb[0].mxu0
      %v1085 = vadd.f32 %v789, %v1084
      %v1086 = vpop.f32.mrb[0].mxu0
      %1087 = vmatprep.mubr.bf16.mxu0 %v890
      %1088 = vmatmul.mubr.bf16.gmra.mrb[0].mxu0 %v889
      %v1089 = vpop.f32.mrb[0].mxu0
      %v1090 = vadd.f32 %v789, %v1089
      %v1091 = vpop.f32.mrb[0].mxu0
      %v1092 = vpop.f32.mrb[0].mxu0
      %v1093 = vadd.f32 %v789, %v1092
      %v1094 = vpop.f32.mrb[0].mxu0
      %1095 = vmatprep.mubr.bf16.mxu0 %v892
      %1096 = vmatmul.mubr.bf16.gmra.mrb[0].mxu0 %v891
      %v1097 = vpop.f32.mrb[0].mxu0
      %v1098 = vadd.f32 %v789, %v1097
      %v1099 = vpop.f32.mrb[0].mxu0
      %v1100 = vpop.f32.mrb[0].mxu0
      %v1101 = vadd.f32 %v789, %v1100
      %v1102 = vpop.f32.mrb[0].mxu0
      %1103 = vmatprep.mubr.bf16.mxu0 %v894
      %1104 = vmatmul.mubr.bf16.gmra.mrb[0].mxu0 %v893
      %v1105 = vpop.f32.mrb[0].mxu0
      %v1106 = vadd.f32 %v789, %v1105
      %v1107 = vpop.f32.mrb[0].mxu0
      %v1108 = vpop.f32.mrb[0].mxu0
      %v1109 = vadd.f32 %v789, %v1108
      %v1110 = vpop.f32.mrb[0].mxu0
      %1111 = vmatprep.mubr.bf16.mxu0 %v896
      %1112 = vmatmul.mubr.bf16.gmra.mrb[0].mxu0 %v895
      %v1113 = vpop.f32.mrb[0].mxu0
      %v1114 = vadd.f32 %v789, %v1113
      %v1115 = vpop.f32.mrb[0].mxu0
      %v1116 = vpop.f32.mrb[0].mxu0
      %v1117 = vadd.f32 %v789, %v1116
      %v1118 = vpop.f32.mrb[0].mxu0
      %1119 = vmatprep.mubr.bf16.mxu0 %v898
      %1120 = vmatmul.mubr.bf16.gmra.mrb[0].mxu0 %v897
      %v1121 = vpop.f32.mrb[0].mxu0
      %v1122 = vadd.f32 %v789, %v1121
      %v1123 = vpop.f32.mrb[0].mxu0
      %v1124 = vpop.f32.mrb[0].mxu0
      %v1125 = vadd.f32 %v789, %v1124
      %v1126 = vpop.f32.mrb[0].mxu0
      %1127 = vmatprep.mubr.bf16.mxu0 %v900
      %1128 = vmatmul.mubr.bf16.gmra.mrb[0].mxu0 %v899
      %v1129 = vpop.f32.mrb[0].mxu0
      %v1130 = vadd.f32 %v789, %v1129
      %v1131 = vpop.f32.mrb[0].mxu0
      %v1132 = vpop.f32.mrb[0].mxu0
      %v1133 = vadd.f32 %v789, %v1132
      %v1134 = vpop.f32.mrb[0].mxu0
      %1135 = vmatprep.mubr.bf16.mxu0 %v902
      %1136 = vmatmul.mubr.bf16.gmra.mrb[0].mxu0 %v901
      %v1137 = vpop.f32.mrb[0].mxu0
      %v1138 = vadd.f32 %v789, %v1137
      %v1139 = vpop.f32.mrb[0].mxu0
      %v1140 = vpop.f32.mrb[0].mxu0
      %v1141 = vadd.f32 %v789, %v1140
      %v1142 = vpop.f32.mrb[0].mxu0
      %1143 = vmatprep.mubr.bf16.mxu0 %v904
      %1144 = vmatmul.mubr.bf16.gmra.mrb[0].mxu0 %v903
      %v1145 = vpop.f32.mrb[0].mxu0
      %v1146 = vadd.f32 %v789, %v1145
      %v1147 = vpop.f32.mrb[0].mxu0
      %v1148 = vpop.f32.mrb[0].mxu0
      %v1149 = vadd.f32 %v789, %v1148
      %v1150 = vpop.f32.mrb[0].mxu0
      %1151 = vmatprep.mubr.bf16.mxu0 %v906
      %1152 = vmatmul.mubr.bf16.gmra.mrb[0].mxu0 %v905
      %v1153 = vpop.f32.mrb[0].mxu0
      %v1154 = vadd.f32 %v789, %v1153
      %v1155 = vpop.f32.mrb[0].mxu0
      %v1156 = vpop.f32.mrb[0].mxu0
      %v1157 = vadd.f32 %v789, %v1156
      %v1158 = vpop.f32.mrb[0].mxu0
      %1159 = vmatprep.mubr.bf16.mxu0 %v908
      %1160 = vmatmul.mubr.bf16.gmra.mrb[0].mxu0 %v907
      %v1161 = vpop.f32.mrb[0].mxu0
      %v1162 = vadd.f32 %v789, %v1161
      %v1163 = vpop.f32.mrb[0].mxu0
      %v1164 = vpop.f32.mrb[0].mxu0
      %v1165 = vadd.f32 %v789, %v1164
      %v1166 = vpop.f32.mrb[0].mxu0
      %1167 = vmatprep.mubr.bf16.mxu0 %v910
      %1168 = vmatmul.mubr.bf16.gmra.mrb[0].mxu0 %v909
      %v1169 = vpop.f32.mrb[0].mxu0
      %v1170 = vadd.f32 %v789, %v1169
      %v1171 = vpop.f32.mrb[0].mxu0
      %v1172 = vpop.f32.mrb[0].mxu0
      %v1173 = vadd.f32 %v789, %v1172
      %v1174 = vpop.f32.mrb[0].mxu0
      %1175 = vmatprep.mubr.bf16.mxu0 %v912
      %1176 = vmatmul.mubr.bf16.gmra.mrb[0].mxu0 %v911
      %v1177 = vpop.f32.mrb[0].mxu0
      %v1178 = vadd.f32 %v789, %v1177
      %v1179 = vpop.f32.mrb[0].mxu0
      %v1180 = vpop.f32.mrb[0].mxu0
      %v1181 = vadd.f32 %v789, %v1180
      %v1182 = vpop.f32.mrb[0].mxu0
      %1183 = vmatprep.mubr.bf16.mxu0 %v914
      %1184 = vmatmul.mubr.bf16.gmra.mrb[0].mxu0 %v913
      %v1185 = vpop.f32.mrb[0].mxu0
      %v1186 = vadd.f32 %v789, %v1185
      %v1187 = vpop.f32.mrb[0].mxu0
      %v1188 = vpop.f32.mrb[0].mxu0
      %v1189 = vadd.f32 %v789, %v1188
      %v1190 = vpop.f32.mrb[0].mxu0
      %1191 = vmatprep.mubr.bf16.mxu0 %v916
      %1192 = vmatmul.mubr.bf16.gmra.mrb[0].mxu0 %v915
      %v1193 = vpop.f32.mrb[0].mxu0
      %v1194 = vadd.f32 %v789, %v1193
      %v1195 = vpop.f32.mrb[0].mxu0
      %v1196 = vpop.f32.mrb[0].mxu0
      %v1197 = vadd.f32 %v789, %v1196
      %v1198 = vpop.f32.mrb[0].mxu0
      %1199 = vmatprep.mubr.bf16.mxu0 %v918
      %1200 = vmatmul.mubr.bf16.gmra.mrb[0].mxu0 %v917
      %v1201 = vpop.f32.mrb[0].mxu0
      %v1202 = vadd.f32 %v789, %v1201
      %v1203 = vpop.f32.mrb[0].mxu0
      %v1204 = vpop.f32.mrb[0].mxu0
      %v1205 = vadd.f32 %v789, %v1204
      %v1206 = vpop.f32.mrb[0].mxu0
      %1207 = vdwg.mxu0
      %vm1208 = vcmask 64512
      %v1209 = vsel %vm1208, %v626, -inf
      %v1210 = vsel %vm1208, %v629, -inf
      %v1211 = vmax.f32 %v1209, %v1210
      %v1212 = vsel %vm1208, %v634, -inf
      %v1213 = vmax.f32 %v1211, %v1212
      %v1214 = vsel %vm1208, %v637, -inf
      %v1215 = vmax.f32 %v1213, %v1214
      %v1216 = vrot.slane %v1215, 4
      %v1217 = vmax.f32 %v1215, %v1216
      %v1218 = vrot.slane %v1217, 2
      %v1219 = vmax.f32 %v1217, %v1218
      %v1220 = vrot.slane %v1219, 1
      %v1221 = vmax.f32 %v1219, %v1220
      %v1222 = vsel %vm1208, %v642, -inf
      %v1223 = vsel %vm1208, %v645, -inf
      %v1224 = vmax.f32 %v1222, %v1223
      %v1225 = vsel %vm1208, %v650, -inf
      %v1226 = vmax.f32 %v1224, %v1225
      %v1227 = vsel %vm1208, %v653, -inf
      %v1228 = vmax.f32 %v1226, %v1227
      %v1229 = vrot.slane %v1228, 4
      %v1230 = vmax.f32 %v1228, %v1229
      %v1231 = vrot.slane %v1230, 2
      %v1232 = vmax.f32 %v1230, %v1231
      %v1233 = vrot.slane %v1232, 1
      %v1234 = vmax.f32 %v1232, %v1233
      %v1235 = vsel %vm1208, %v658, -inf
      %v1236 = vsel %vm1208, %v661, -inf
      %v1237 = vmax.f32 %v1235, %v1236
      %v1238 = vsel %vm1208, %v666, -inf
      %v1239 = vmax.f32 %v1237, %v1238
      %v1240 = vsel %vm1208, %v669, -inf
      %v1241 = vmax.f32 %v1239, %v1240
      %v1242 = vrot.slane %v1241, 4
      %v1243 = vmax.f32 %v1241, %v1242
      %v1244 = vrot.slane %v1243, 2
      %v1245 = vmax.f32 %v1243, %v1244
      %v1246 = vrot.slane %v1245, 1
      %v1247 = vmax.f32 %v1245, %v1246
      %v1248 = vsel %vm1208, %v674, -inf
      %v1249 = vsel %vm1208, %v677, -inf
      %v1250 = vmax.f32 %v1248, %v1249
      %v1251 = vsel %vm1208, %v682, -inf
      %v1252 = vmax.f32 %v1250, %v1251
      %v1253 = vsel %vm1208, %v685, -inf
      %v1254 = vmax.f32 %v1252, %v1253
      %v1255 = vrot.slane %v1254, 4
      %v1256 = vmax.f32 %v1254, %v1255
      %v1257 = vrot.slane %v1256, 2
      %v1258 = vmax.f32 %v1256, %v1257
      %v1259 = vrot.slane %v1258, 1
      %v1260 = vmax.f32 %v1258, %v1259
      %v1261 = vsel %vm1208, %v690, -inf
      %v1262 = vsel %vm1208, %v693, -inf
      %v1263 = vmax.f32 %v1261, %v1262
      %v1264 = vsel %vm1208, %v698, -inf
      %v1265 = vmax.f32 %v1263, %v1264
      %v1266 = vsel %vm1208, %v701, -inf
      %v1267 = vmax.f32 %v1265, %v1266
      %v1268 = vrot.slane %v1267, 4
      %v1269 = vmax.f32 %v1267, %v1268
      %v1270 = vrot.slane %v1269, 2
      %v1271 = vmax.f32 %v1269, %v1270
      %v1272 = vrot.slane %v1271, 1
      %v1273 = vmax.f32 %v1271, %v1272
      %v1274 = vsel %vm1208, %v706, -inf
      %v1275 = vsel %vm1208, %v709, -inf
      %v1276 = vmax.f32 %v1274, %v1275
      %v1277 = vsel %vm1208, %v714, -inf
      %v1278 = vmax.f32 %v1276, %v1277
      %v1279 = vsel %vm1208, %v717, -inf
      %v1280 = vmax.f32 %v1278, %v1279
      %v1281 = vrot.slane %v1280, 4
      %v1282 = vmax.f32 %v1280, %v1281
      %v1283 = vrot.slane %v1282, 2
      %v1284 = vmax.f32 %v1282, %v1283
      %v1285 = vrot.slane %v1284, 1
      %v1286 = vmax.f32 %v1284, %v1285
      %v1287 = vsel %vm1208, %v722, -inf
      %v1288 = vsel %vm1208, %v725, -inf
      %v1289 = vmax.f32 %v1287, %v1288
      %v1290 = vsel %vm1208, %v730, -inf
      %v1291 = vmax.f32 %v1289, %v1290
      %v1292 = vsel %vm1208, %v733, -inf
      %v1293 = vmax.f32 %v1291, %v1292
      %v1294 = vrot.slane %v1293, 4
      %v1295 = vmax.f32 %v1293, %v1294
      %v1296 = vrot.slane %v1295, 2
      %v1297 = vmax.f32 %v1295, %v1296
      %v1298 = vrot.slane %v1297, 1
      %v1299 = vmax.f32 %v1297, %v1298
      %v1300 = vsel %vm1208, %v738, -inf
      %v1301 = vsel %vm1208, %v741, -inf
      %v1302 = vmax.f32 %v1300, %v1301
      %v1303 = vsel %vm1208, %v746, -inf
      %v1304 = vmax.f32 %v1302, %v1303
      %v1305 = vsel %vm1208, %v749, -inf
      %v1306 = vmax.f32 %v1304, %v1305
      %v1307 = vrot.slane %v1306, 4
      %v1308 = vmax.f32 %v1306, %v1307
      %v1309 = vrot.slane %v1308, 2
      %v1310 = vmax.f32 %v1308, %v1309
      %v1311 = vrot.slane %v1310, 1
      %v1312 = vmax.f32 %v1310, %v1311
      %v1313 = vsub.f32 %v626, %v1221
      %v1314 = vsub.f32 %v629, %v1221
      %v1315 = vsub.f32 %v634, %v1221
      %v1316 = vsub.f32 %v637, %v1221
      %v1317 = vsub.f32 %v642, %v1234
      %v1318 = vsub.f32 %v645, %v1234
      %v1319 = vsub.f32 %v650, %v1234
      %v1320 = vsub.f32 %v653, %v1234
      %v1321 = vsub.f32 %v658, %v1247
      %v1322 = vsub.f32 %v661, %v1247
      %v1323 = vsub.f32 %v666, %v1247
      %v1324 = vsub.f32 %v669, %v1247
      %v1325 = vsub.f32 %v674, %v1260
      %v1326 = vsub.f32 %v677, %v1260
      %v1327 = vsub.f32 %v682, %v1260
      %v1328 = vsub.f32 %v685, %v1260
      %v1329 = vsub.f32 %v690, %v1273
      %v1330 = vsub.f32 %v693, %v1273
      %v1331 = vsub.f32 %v698, %v1273
      %v1332 = vsub.f32 %v701, %v1273
      %v1333 = vsub.f32 %v706, %v1286
      %v1334 = vsub.f32 %v709, %v1286
      %v1335 = vsub.f32 %v714, %v1286
      %v1336 = vsub.f32 %v717, %v1286
      %v1337 = vsub.f32 %v722, %v1299
      %v1338 = vsub.f32 %v725, %v1299
      %v1339 = vsub.f32 %v730, %v1299
      %v1340 = vsub.f32 %v733, %v1299
      %v1341 = vsub.f32 %v738, %v1312
      %v1342 = vsub.f32 %v741, %v1312
      %v1343 = vsub.f32 %v746, %v1312
      %v1344 = vsub.f32 %v749, %v1312
      %v1345 = vmul.f32 %v1313, 1.442695
      %v1346 = vpow.pop %v1345
      %v1347 = vmul.f32 %v1314, 1.442695
      %v1348 = vpow.pop %v1347
      %v1349 = vmul.f32 %v1315, 1.442695
      %v1350 = vpow.pop %v1349
      %v1351 = vmul.f32 %v1316, 1.442695
      %v1352 = vpow.pop %v1351
      %v1353 = vmul.f32 %v1317, 1.442695
      %v1354 = vpow.pop %v1353
      %v1355 = vmul.f32 %v1318, 1.442695
      %v1356 = vpow.pop %v1355
      %v1357 = vmul.f32 %v1319, 1.442695
      %v1358 = vpow.pop %v1357
      %v1359 = vmul.f32 %v1320, 1.442695
      %v1360 = vpow.pop %v1359
      %v1361 = vmul.f32 %v1321, 1.442695
      %v1362 = vpow.pop %v1361
      %v1363 = vmul.f32 %v1322, 1.442695
      %v1364 = vpow.pop %v1363
      %v1365 = vmul.f32 %v1323, 1.442695
      %v1366 = vpow.pop %v1365
      %v1367 = vmul.f32 %v1324, 1.442695
      %v1368 = vpow.pop %v1367
      %v1369 = vmul.f32 %v1325, 1.442695
      %v1370 = vpow.pop %v1369
      %v1371 = vmul.f32 %v1326, 1.442695
      %v1372 = vpow.pop %v1371
      %v1373 = vmul.f32 %v1327, 1.442695
      %v1374 = vpow.pop %v1373
      %v1375 = vmul.f32 %v1328, 1.442695
      %v1376 = vpow.pop %v1375
      %v1377 = vmul.f32 %v1329, 1.442695
      %v1378 = vpow.pop %v1377
      %v1379 = vmul.f32 %v1330, 1.442695
      %v1380 = vpow.pop %v1379
      %v1381 = vmul.f32 %v1331, 1.442695
      %v1382 = vpow.pop %v1381
      %v1383 = vmul.f32 %v1332, 1.442695
      %v1384 = vpow.pop %v1383
      %v1385 = vmul.f32 %v1333, 1.442695
      %v1386 = vpow.pop %v1385
      %v1387 = vmul.f32 %v1334, 1.442695
      %v1388 = vpow.pop %v1387
      %v1389 = vmul.f32 %v1335, 1.442695
      %v1390 = vpow.pop %v1389
      %v1391 = vmul.f32 %v1336, 1.442695
      %v1392 = vpow.pop %v1391
      %v1393 = vmul.f32 %v1337, 1.442695
      %v1394 = vpow.pop %v1393
      %v1395 = vmul.f32 %v1338, 1.442695
      %v1396 = vpow.pop %v1395
      %v1397 = vmul.f32 %v1339, 1.442695
      %v1398 = vpow.pop %v1397
      %v1399 = vmul.f32 %v1340, 1.442695
      %v1400 = vpow.pop %v1399
      %v1401 = vmul.f32 %v1341, 1.442695
      %v1402 = vpow.pop %v1401
      %v1403 = vmul.f32 %v1342, 1.442695
      %v1404 = vpow.pop %v1403
      %v1405 = vmul.f32 %v1343, 1.442695
      %v1406 = vpow.pop %v1405
      %v1407 = vmul.f32 %v1344, 1.442695
      %v1408 = vpow.pop %v1407
      %v1409 = vsel %vm1208, %v1346, 0.0
      %v1410 = vsel %vm1208, %v1348, 0.0
      %v1411 = vadd.f32 %v1409, %v1410
      %v1412 = vsel %vm1208, %v1350, 0.0
      %v1413 = vadd.f32 %v1411, %v1412
      %v1414 = vsel %vm1208, %v1352, 0.0
      %v1415 = vadd.f32 %v1413, %v1414
      %v1416 = vrot.slane %v1415, 4
      %v1417 = vadd.f32 %v1415, %v1416
      %v1418 = vrot.slane %v1417, 2
      %v1419 = vadd.f32 %v1417, %v1418
      %v1420 = vrot.slane %v1419, 1
      %v1421 = vadd.f32 %v1419, %v1420
      %v1422 = vsel %vm1208, %v1354, 0.0
      %v1423 = vsel %vm1208, %v1356, 0.0
      %v1424 = vadd.f32 %v1422, %v1423
      %v1425 = vsel %vm1208, %v1358, 0.0
      %v1426 = vadd.f32 %v1424, %v1425
      %v1427 = vsel %vm1208, %v1360, 0.0
      %v1428 = vadd.f32 %v1426, %v1427
      %v1429 = vrot.slane %v1428, 4
      %v1430 = vadd.f32 %v1428, %v1429
      %v1431 = vrot.slane %v1430, 2
      %v1432 = vadd.f32 %v1430, %v1431
      %v1433 = vrot.slane %v1432, 1
      %v1434 = vadd.f32 %v1432, %v1433
      %v1435 = vsel %vm1208, %v1362, 0.0
      %v1436 = vsel %vm1208, %v1364, 0.0
      %v1437 = vadd.f32 %v1435, %v1436
      %v1438 = vsel %vm1208, %v1366, 0.0
      %v1439 = vadd.f32 %v1437, %v1438
      %v1440 = vsel %vm1208, %v1368, 0.0
      %v1441 = vadd.f32 %v1439, %v1440
      %v1442 = vrot.slane %v1441, 4
      %v1443 = vadd.f32 %v1441, %v1442
      %v1444 = vrot.slane %v1443, 2
      %v1445 = vadd.f32 %v1443, %v1444
      %v1446 = vrot.slane %v1445, 1
      %v1447 = vadd.f32 %v1445, %v1446
      %v1448 = vsel %vm1208, %v1370, 0.0
      %v1449 = vsel %vm1208, %v1372, 0.0
      %v1450 = vadd.f32 %v1448, %v1449
      %v1451 = vsel %vm1208, %v1374, 0.0
      %v1452 = vadd.f32 %v1450, %v1451
      %v1453 = vsel %vm1208, %v1376, 0.0
      %v1454 = vadd.f32 %v1452, %v1453
      %v1455 = vrot.slane %v1454, 4
      %v1456 = vadd.f32 %v1454, %v1455
      %v1457 = vrot.slane %v1456, 2
      %v1458 = vadd.f32 %v1456, %v1457
      %v1459 = vrot.slane %v1458, 1
      %v1460 = vadd.f32 %v1458, %v1459
      %v1461 = vsel %vm1208, %v1378, 0.0
      %v1462 = vsel %vm1208, %v1380, 0.0
      %v1463 = vadd.f32 %v1461, %v1462
      %v1464 = vsel %vm1208, %v1382, 0.0
      %v1465 = vadd.f32 %v1463, %v1464
      %v1466 = vsel %vm1208, %v1384, 0.0
      %v1467 = vadd.f32 %v1465, %v1466
      %v1468 = vrot.slane %v1467, 4
      %v1469 = vadd.f32 %v1467, %v1468
      %v1470 = vrot.slane %v1469, 2
      %v1471 = vadd.f32 %v1469, %v1470
      %v1472 = vrot.slane %v1471, 1
      %v1473 = vadd.f32 %v1471, %v1472
      %v1474 = vsel %vm1208, %v1386, 0.0
      %v1475 = vsel %vm1208, %v1388, 0.0
      %v1476 = vadd.f32 %v1474, %v1475
      %v1477 = vsel %vm1208, %v1390, 0.0
      %v1478 = vadd.f32 %v1476, %v1477
      %v1479 = vsel %vm1208, %v1392, 0.0
      %v1480 = vadd.f32 %v1478, %v1479
      %v1481 = vrot.slane %v1480, 4
      %v1482 = vadd.f32 %v1480, %v1481
      %v1483 = vrot.slane %v1482, 2
      %v1484 = vadd.f32 %v1482, %v1483
      %v1485 = vrot.slane %v1484, 1
      %v1486 = vadd.f32 %v1484, %v1485
      %v1487 = vsel %vm1208, %v1394, 0.0
      %v1488 = vsel %vm1208, %v1396, 0.0
      %v1489 = vadd.f32 %v1487, %v1488
      %v1490 = vsel %vm1208, %v1398, 0.0
      %v1491 = vadd.f32 %v1489, %v1490
      %v1492 = vsel %vm1208, %v1400, 0.0
      %v1493 = vadd.f32 %v1491, %v1492
      %v1494 = vrot.slane %v1493, 4
      %v1495 = vadd.f32 %v1493, %v1494
      %v1496 = vrot.slane %v1495, 2
      %v1497 = vadd.f32 %v1495, %v1496
      %v1498 = vrot.slane %v1497, 1
      %v1499 = vadd.f32 %v1497, %v1498
      %v1500 = vsel %vm1208, %v1402, 0.0
      %v1501 = vsel %vm1208, %v1404, 0.0
      %v1502 = vadd.f32 %v1500, %v1501
      %v1503 = vsel %vm1208, %v1406, 0.0
      %v1504 = vadd.f32 %v1502, %v1503
      %v1505 = vsel %vm1208, %v1408, 0.0
      %v1506 = vadd.f32 %v1504, %v1505
      %v1507 = vrot.slane %v1506, 4
      %v1508 = vadd.f32 %v1506, %v1507
      %v1509 = vrot.slane %v1508, 2
      %v1510 = vadd.f32 %v1508, %v1509
      %v1511 = vrot.slane %v1510, 1
      %v1512 = vadd.f32 %v1510, %v1511
      %v1513 = vrcp.pop %v1421
      %v1514 = vrcp.pop %v1434
      %v1515 = vrcp.pop %v1447
      %v1516 = vrcp.pop %v1460
      %v1517 = vrcp.pop %v1473
      %v1518 = vrcp.pop %v1486
      %v1519 = vrcp.pop %v1499
      %v1520 = vrcp.pop %v1512
      %v1521 = vmul.f32 %v1346, %v1513
      %v1522 = vmul.f32 %v1348, %v1513
      %v1523 = vmul.f32 %v1350, %v1513
      %v1524 = vmul.f32 %v1352, %v1513
      %v1525 = vmul.f32 %v1354, %v1514
      %v1526 = vmul.f32 %v1356, %v1514
      %v1527 = vmul.f32 %v1358, %v1514
      %v1528 = vmul.f32 %v1360, %v1514
      %v1529 = vmul.f32 %v1362, %v1515
      %v1530 = vmul.f32 %v1364, %v1515
      %v1531 = vmul.f32 %v1366, %v1515
      %v1532 = vmul.f32 %v1368, %v1515
      %v1533 = vmul.f32 %v1370, %v1516
      %v1534 = vmul.f32 %v1372, %v1516
      %v1535 = vmul.f32 %v1374, %v1516
      %v1536 = vmul.f32 %v1376, %v1516
      %v1537 = vmul.f32 %v1378, %v1517
      %v1538 = vmul.f32 %v1380, %v1517
      %v1539 = vmul.f32 %v1382, %v1517
      %v1540 = vmul.f32 %v1384, %v1517
      %v1541 = vmul.f32 %v1386, %v1518
      %v1542 = vmul.f32 %v1388, %v1518
      %v1543 = vmul.f32 %v1390, %v1518
      %v1544 = vmul.f32 %v1392, %v1518
      %v1545 = vmul.f32 %v1394, %v1519
      %v1546 = vmul.f32 %v1396, %v1519
      %v1547 = vmul.f32 %v1398, %v1519
      %v1548 = vmul.f32 %v1400, %v1519
      %v1549 = vmul.f32 %v1402, %v1520
      %v1550 = vmul.f32 %v1404, %v1520
      %v1551 = vmul.f32 %v1406, %v1520
      %v1552 = vmul.f32 %v1408, %v1520
      %v1553 = vpack.c.bf16 %v1522, %v1521
      %v1554 = vpack.c.bf16 %v1524, %v1523
      %v1555 = vpack.c.bf16 %v1526, %v1525
      %v1556 = vpack.c.bf16 %v1528, %v1527
      %v1557 = vpack.c.bf16 %v1530, %v1529
      %v1558 = vpack.c.bf16 %v1532, %v1531
      %v1559 = vpack.c.bf16 %v1534, %v1533
      %v1560 = vpack.c.bf16 %v1536, %v1535
      %v1561 = vpack.c.bf16 %v1538, %v1537
      %v1562 = vpack.c.bf16 %v1540, %v1539
      %v1563 = vpack.c.bf16 %v1542, %v1541
      %v1564 = vpack.c.bf16 %v1544, %v1543
      %v1565 = vpack.c.bf16 %v1546, %v1545
      %v1566 = vpack.c.bf16 %v1548, %v1547
      %v1567 = vpack.c.bf16 %v1550, %v1549
      %v1568 = vpack.c.bf16 %v1552, %v1551
      %v1569 = vpack.c.bf16 %v1085, %v1082
      %v1570 = vpack.c.bf16 %v1093, %v1090
      %v1571 = vpack.c.bf16 %v1101, %v1098
      %v1572 = vpack.c.bf16 %v1109, %v1106
      %v1573 = vpack.c.bf16 %v1117, %v1114
      %v1574 = vpack.c.bf16 %v1125, %v1122
      %v1575 = vpack.c.bf16 %v1133, %v1130
      %v1576 = vpack.c.bf16 %v1141, %v1138
      %v1577 = vpack.c.bf16 %v1149, %v1146
      %v1578 = vpack.c.bf16 %v1157, %v1154
      %v1579 = vpack.c.bf16 %v1165, %v1162
      %v1580 = vpack.c.bf16 %v1173, %v1170
      %v1581 = vpack.c.bf16 %v1181, %v1178
      %v1582 = vpack.c.bf16 %v1189, %v1186
      %v1583 = vpack.c.bf16 %v1197, %v1194
      %v1584 = vpack.c.bf16 %v1205, %v1202
      %1585 = vxpose.xlu0.c.b16.start [1/8] %v1553, 128
      %1586 = vxpose.xlu0.c.b16.cont [2/8] %v1554, 128
      %1587 = vxpose.xlu0.c.b16.cont [3/8] 0, 128
      %1588 = vxpose.xlu0.c.b16.cont [4/8] 0, 128
      %1589 = vxpose.xlu0.c.b16.cont [5/8] 0, 128
      %1590 = vxpose.xlu0.c.b16.cont [6/8] 0, 128
      %1591 = vxpose.xlu0.c.b16.cont [7/8] 0, 128
      %1592 = vxpose.xlu0.c.b16.end [8/8] 0, 128
      %v1593 = vpop.trf.xlu0
      %v1594 = vpop.trf.xlu0
      %v1595 = vpop.trf.xlu0
      %v1596 = vpop.trf.xlu0
      %v1597 = vpop.trf.xlu0
      %v1598 = vpop.trf.xlu0
      %v1599 = vpop.trf.xlu0
      %v1600 = vpop.trf.xlu0
      %vm1601 = vcmask 261120
      %v1603 = vsel %vm1601, %v1593, 0
      %1605 = vmatprep.subr.bf16.mxu0 0
      %1606 = vmatpush1.bf16.msra.mxu0 %v1569
      %1607 = vmatprep.subr.bf16.mxu0 0
      %1608 = vmatpush1.bf16.msra.mxu0 %v1570
      %1609 = vmatprep.subr.bf16.mxu0 0
      %1610 = vmatpush1.bf16.msra.mxu0 0
      %1611 = vmatprep.subr.bf16.mxu0 0
      %1612 = vmatpush1.bf16.msra.mxu0 0
      %1613 = vmatprep.subr.bf16.mxu0 0
      %1614 = vmatpush1.bf16.msra.mxu0 0
      %1615 = vmatprep.subr.bf16.mxu0 0
      %1616 = vmatpush1.bf16.msra.mxu0 0
      %1617 = vmatprep.subr.bf16.mxu0 0
      %1618 = vmatpush1.bf16.msra.mxu0 0
      %1619 = vmatprep.subr.bf16.mxu0 0
      %1620 = vmatpush1.bf16.msra.mxu0 0
      %1621 = vmatprep.subr.bf16.mxu0 0
      %1622 = vmatpush1.bf16.msra.mxu0 0
      %1623 = vmatprep.subr.bf16.mxu0 0
      %1624 = vmatpush1.bf16.msra.mxu0 0
      %1625 = vmatprep.subr.bf16.mxu0 0
      %1626 = vmatpush1.bf16.msra.mxu0 0
      %1627 = vmatprep.subr.bf16.mxu0 0
      %1628 = vmatpush1.bf16.msra.mxu0 0
      %1629 = vmatprep.subr.bf16.mxu0 0
      %1630 = vmatpush1.bf16.msra.mxu0 0
      %1631 = vmatprep.subr.bf16.mxu0 0
      %1632 = vmatpush1.bf16.msra.mxu0 0
      %1633 = vmatprep.subr.bf16.mxu0 0
      %1634 = vmatpush1.bf16.msra.mxu0 0
      %1635 = vmatprep.subr.bf16.mxu0 0
      %1636 = vmatpush1.bf16.msra.mxu0 0
      %1637 = vmatprep.mubr.bf16.mxu0 0
      %1638 = vmatmul.mubr.bf16.gmra.mrb[0].mxu0 %v1603
      %v1639 = vpop.f32.mrb[0].mxu0
      %v1640 = vadd.f32 0.0, %v1639
      %v1641 = vpop.f32.mrb[0].mxu0
      %v1642 = vpop.f32.mrb[0].mxu0
      %v1643 = vpop.f32.mrb[0].mxu0
      %1644 = vdwg.mxu0
      %1645 = vxpose.xlu0.c.b16.start [1/8] %v1555, 128
      %1646 = vxpose.xlu0.c.b16.cont [2/8] %v1556, 128
      %1647 = vxpose.xlu0.c.b16.cont [3/8] 0, 128
      %1648 = vxpose.xlu0.c.b16.cont [4/8] 0, 128
      %1649 = vxpose.xlu0.c.b16.cont [5/8] 0, 128
      %1650 = vxpose.xlu0.c.b16.cont [6/8] 0, 128
      %1651 = vxpose.xlu0.c.b16.cont [7/8] 0, 128
      %1652 = vxpose.xlu0.c.b16.end [8/8] 0, 128
      %v1653 = vpop.trf.xlu0
      %v1654 = vpop.trf.xlu0
      %v1655 = vpop.trf.xlu0
      %v1656 = vpop.trf.xlu0
      %v1657 = vpop.trf.xlu0
      %v1658 = vpop.trf.xlu0
      %v1659 = vpop.trf.xlu0
      %v1660 = vpop.trf.xlu0
      %v1662 = vsel %vm1601, %v1653, 0
      %1664 = vmatprep.subr.bf16.mxu0 0
      %1665 = vmatpush1.bf16.msra.mxu0 %v1571
      %1666 = vmatprep.subr.bf16.mxu0 0
      %1667 = vmatpush1.bf16.msra.mxu0 %v1572
      %1668 = vmatprep.subr.bf16.mxu0 0
      %1669 = vmatpush1.bf16.msra.mxu0 0
      %1670 = vmatprep.subr.bf16.mxu0 0
      %1671 = vmatpush1.bf16.msra.mxu0 0
      %1672 = vmatprep.subr.bf16.mxu0 0
      %1673 = vmatpush1.bf16.msra.mxu0 0
      %1674 = vmatprep.subr.bf16.mxu0 0
      %1675 = vmatpush1.bf16.msra.mxu0 0
      %1676 = vmatprep.subr.bf16.mxu0 0
      %1677 = vmatpush1.bf16.msra.mxu0 0
      %1678 = vmatprep.subr.bf16.mxu0 0
      %1679 = vmatpush1.bf16.msra.mxu0 0
      %1680 = vmatprep.subr.bf16.mxu0 0
      %1681 = vmatpush1.bf16.msra.mxu0 0
      %1682 = vmatprep.subr.bf16.mxu0 0
      %1683 = vmatpush1.bf16.msra.mxu0 0
      %1684 = vmatprep.subr.bf16.mxu0 0
      %1685 = vmatpush1.bf16.msra.mxu0 0
      %1686 = vmatprep.subr.bf16.mxu0 0
      %1687 = vmatpush1.bf16.msra.mxu0 0
      %1688 = vmatprep.subr.bf16.mxu0 0
      %1689 = vmatpush1.bf16.msra.mxu0 0
      %1690 = vmatprep.subr.bf16.mxu0 0
      %1691 = vmatpush1.bf16.msra.mxu0 0
      %1692 = vmatprep.subr.bf16.mxu0 0
      %1693 = vmatpush1.bf16.msra.mxu0 0
      %1694 = vmatprep.subr.bf16.mxu0 0
      %1695 = vmatpush1.bf16.msra.mxu0 0
      %1696 = vmatprep.mubr.bf16.mxu0 0
      %1697 = vmatmul.mubr.bf16.gmra.mrb[0].mxu0 %v1662
      %v1698 = vpop.f32.mrb[0].mxu0
      %v1699 = vadd.f32 0.0, %v1698
      %v1700 = vpop.f32.mrb[0].mxu0
      %v1701 = vpop.f32.mrb[0].mxu0
      %v1702 = vpop.f32.mrb[0].mxu0
      %1703 = vdwg.mxu0
      %1704 = vxpose.xlu0.c.b16.start [1/8] %v1557, 128
      %1705 = vxpose.xlu0.c.b16.cont [2/8] %v1558, 128
      %1706 = vxpose.xlu0.c.b16.cont [3/8] 0, 128
      %1707 = vxpose.xlu0.c.b16.cont [4/8] 0, 128
      %1708 = vxpose.xlu0.c.b16.cont [5/8] 0, 128
      %1709 = vxpose.xlu0.c.b16.cont [6/8] 0, 128
      %1710 = vxpose.xlu0.c.b16.cont [7/8] 0, 128
      %1711 = vxpose.xlu0.c.b16.end [8/8] 0, 128
      %v1712 = vpop.trf.xlu0
      %v1713 = vpop.trf.xlu0
      %v1714 = vpop.trf.xlu0
      %v1715 = vpop.trf.xlu0
      %v1716 = vpop.trf.xlu0
      %v1717 = vpop.trf.xlu0
      %v1718 = vpop.trf.xlu0
      %v1719 = vpop.trf.xlu0
      %v1721 = vsel %vm1601, %v1712, 0
      %1723 = vmatprep.subr.bf16.mxu0 0
      %1724 = vmatpush1.bf16.msra.mxu0 %v1573
      %1725 = vmatprep.subr.bf16.mxu0 0
      %1726 = vmatpush1.bf16.msra.mxu0 %v1574
      %1727 = vmatprep.subr.bf16.mxu0 0
      %1728 = vmatpush1.bf16.msra.mxu0 0
      %1729 = vmatprep.subr.bf16.mxu0 0
      %1730 = vmatpush1.bf16.msra.mxu0 0
      %1731 = vmatprep.subr.bf16.mxu0 0
      %1732 = vmatpush1.bf16.msra.mxu0 0
      %1733 = vmatprep.subr.bf16.mxu0 0
      %1734 = vmatpush1.bf16.msra.mxu0 0
      %1735 = vmatprep.subr.bf16.mxu0 0
      %1736 = vmatpush1.bf16.msra.mxu0 0
      %1737 = vmatprep.subr.bf16.mxu0 0
      %1738 = vmatpush1.bf16.msra.mxu0 0
      %1739 = vmatprep.subr.bf16.mxu0 0
      %1740 = vmatpush1.bf16.msra.mxu0 0
      %1741 = vmatprep.subr.bf16.mxu0 0
      %1742 = vmatpush1.bf16.msra.mxu0 0
      %1743 = vmatprep.subr.bf16.mxu0 0
      %1744 = vmatpush1.bf16.msra.mxu0 0
      %1745 = vmatprep.subr.bf16.mxu0 0
      %1746 = vmatpush1.bf16.msra.mxu0 0
      %1747 = vmatprep.subr.bf16.mxu0 0
      %1748 = vmatpush1.bf16.msra.mxu0 0
      %1749 = vmatprep.subr.bf16.mxu0 0
      %1750 = vmatpush1.bf16.msra.mxu0 0
      %1751 = vmatprep.subr.bf16.mxu0 0
      %1752 = vmatpush1.bf16.msra.mxu0 0
      %1753 = vmatprep.subr.bf16.mxu0 0
      %1754 = vmatpush1.bf16.msra.mxu0 0
      %1755 = vmatprep.mubr.bf16.mxu0 0
      %1756 = vmatmul.mubr.bf16.gmra.mrb[0].mxu0 %v1721
      %v1757 = vpop.f32.mrb[0].mxu0
      %v1758 = vadd.f32 0.0, %v1757
      %v1759 = vpop.f32.mrb[0].mxu0
      %v1760 = vpop.f32.mrb[0].mxu0
      %v1761 = vpop.f32.mrb[0].mxu0
      %1762 = vdwg.mxu0
      %1763 = vxpose.xlu0.c.b16.start [1/8] %v1559, 128
      %1764 = vxpose.xlu0.c.b16.cont [2/8] %v1560, 128
      %1765 = vxpose.xlu0.c.b16.cont [3/8] 0, 128
      %1766 = vxpose.xlu0.c.b16.cont [4/8] 0, 128
      %1767 = vxpose.xlu0.c.b16.cont [5/8] 0, 128
      %1768 = vxpose.xlu0.c.b16.cont [6/8] 0, 128
      %1769 = vxpose.xlu0.c.b16.cont [7/8] 0, 128
      %1770 = vxpose.xlu0.c.b16.end [8/8] 0, 128
      %v1771 = vpop.trf.xlu0
      %v1772 = vpop.trf.xlu0
      %v1773 = vpop.trf.xlu0
      %v1774 = vpop.trf.xlu0
      %v1775 = vpop.trf.xlu0
      %v1776 = vpop.trf.xlu0
      %v1777 = vpop.trf.xlu0
      %v1778 = vpop.trf.xlu0
      %v1780 = vsel %vm1601, %v1771, 0
      %1782 = vmatprep.subr.bf16.mxu0 0
      %1783 = vmatpush1.bf16.msra.mxu0 %v1575
      %1784 = vmatprep.subr.bf16.mxu0 0
      %1785 = vmatpush1.bf16.msra.mxu0 %v1576
      %1786 = vmatprep.subr.bf16.mxu0 0
      %1787 = vmatpush1.bf16.msra.mxu0 0
      %1788 = vmatprep.subr.bf16.mxu0 0
      %1789 = vmatpush1.bf16.msra.mxu0 0
      %1790 = vmatprep.subr.bf16.mxu0 0
      %1791 = vmatpush1.bf16.msra.mxu0 0
      %1792 = vmatprep.subr.bf16.mxu0 0
      %1793 = vmatpush1.bf16.msra.mxu0 0
      %1794 = vmatprep.subr.bf16.mxu0 0
      %1795 = vmatpush1.bf16.msra.mxu0 0
      %1796 = vmatprep.subr.bf16.mxu0 0
      %1797 = vmatpush1.bf16.msra.mxu0 0
      %1798 = vmatprep.subr.bf16.mxu0 0
      %1799 = vmatpush1.bf16.msra.mxu0 0
      %1800 = vmatprep.subr.bf16.mxu0 0
      %1801 = vmatpush1.bf16.msra.mxu0 0
      %1802 = vmatprep.subr.bf16.mxu0 0
      %1803 = vmatpush1.bf16.msra.mxu0 0
      %1804 = vmatprep.subr.bf16.mxu0 0
      %1805 = vmatpush1.bf16.msra.mxu0 0
      %1806 = vmatprep.subr.bf16.mxu0 0
      %1807 = vmatpush1.bf16.msra.mxu0 0
      %1808 = vmatprep.subr.bf16.mxu0 0
      %1809 = vmatpush1.bf16.msra.mxu0 0
      %1810 = vmatprep.subr.bf16.mxu0 0
      %1811 = vmatpush1.bf16.msra.mxu0 0
      %1812 = vmatprep.subr.bf16.mxu0 0
      %1813 = vmatpush1.bf16.msra.mxu0 0
      %1814 = vmatprep.mubr.bf16.mxu0 0
      %1815 = vmatmul.mubr.bf16.gmra.mrb[0].mxu0 %v1780
      %v1816 = vpop.f32.mrb[0].mxu0
      %v1817 = vadd.f32 0.0, %v1816
      %v1818 = vpop.f32.mrb[0].mxu0
      %v1819 = vpop.f32.mrb[0].mxu0
      %v1820 = vpop.f32.mrb[0].mxu0
      %1821 = vdwg.mxu0
      %1822 = vxpose.xlu0.c.b16.start [1/8] %v1561, 128
      %1823 = vxpose.xlu0.c.b16.cont [2/8] %v1562, 128
      %1824 = vxpose.xlu0.c.b16.cont [3/8] 0, 128
      %1825 = vxpose.xlu0.c.b16.cont [4/8] 0, 128
      %1826 = vxpose.xlu0.c.b16.cont [5/8] 0, 128
      %1827 = vxpose.xlu0.c.b16.cont [6/8] 0, 128
      %1828 = vxpose.xlu0.c.b16.cont [7/8] 0, 128
      %1829 = vxpose.xlu0.c.b16.end [8/8] 0, 128
      %v1830 = vpop.trf.xlu0
      %v1831 = vpop.trf.xlu0
      %v1832 = vpop.trf.xlu0
      %v1833 = vpop.trf.xlu0
      %v1834 = vpop.trf.xlu0
      %v1835 = vpop.trf.xlu0
      %v1836 = vpop.trf.xlu0
      %v1837 = vpop.trf.xlu0
      %v1839 = vsel %vm1601, %v1830, 0
      %1841 = vmatprep.subr.bf16.mxu0 0
      %1842 = vmatpush1.bf16.msra.mxu0 %v1577
      %1843 = vmatprep.subr.bf16.mxu0 0
      %1844 = vmatpush1.bf16.msra.mxu0 %v1578
      %1845 = vmatprep.subr.bf16.mxu0 0
      %1846 = vmatpush1.bf16.msra.mxu0 0
      %1847 = vmatprep.subr.bf16.mxu0 0
      %1848 = vmatpush1.bf16.msra.mxu0 0
      %1849 = vmatprep.subr.bf16.mxu0 0
      %1850 = vmatpush1.bf16.msra.mxu0 0
      %1851 = vmatprep.subr.bf16.mxu0 0
      %1852 = vmatpush1.bf16.msra.mxu0 0
      %1853 = vmatprep.subr.bf16.mxu0 0
      %1854 = vmatpush1.bf16.msra.mxu0 0
      %1855 = vmatprep.subr.bf16.mxu0 0
      %1856 = vmatpush1.bf16.msra.mxu0 0
      %1857 = vmatprep.subr.bf16.mxu0 0
      %1858 = vmatpush1.bf16.msra.mxu0 0
      %1859 = vmatprep.subr.bf16.mxu0 0
      %1860 = vmatpush1.bf16.msra.mxu0 0
      %1861 = vmatprep.subr.bf16.mxu0 0
      %1862 = vmatpush1.bf16.msra.mxu0 0
      %1863 = vmatprep.subr.bf16.mxu0 0
      %1864 = vmatpush1.bf16.msra.mxu0 0
      %1865 = vmatprep.subr.bf16.mxu0 0
      %1866 = vmatpush1.bf16.msra.mxu0 0
      %1867 = vmatprep.subr.bf16.mxu0 0
      %1868 = vmatpush1.bf16.msra.mxu0 0
      %1869 = vmatprep.subr.bf16.mxu0 0
      %1870 = vmatpush1.bf16.msra.mxu0 0
      %1871 = vmatprep.subr.bf16.mxu0 0
      %1872 = vmatpush1.bf16.msra.mxu0 0
      %1873 = vmatprep.mubr.bf16.mxu0 0
      %1874 = vmatmul.mubr.bf16.gmra.mrb[0].mxu0 %v1839
      %v1875 = vpop.f32.mrb[0].mxu0
      %v1876 = vadd.f32 0.0, %v1875
      %v1877 = vpop.f32.mrb[0].mxu0
      %v1878 = vpop.f32.mrb[0].mxu0
      %v1879 = vpop.f32.mrb[0].mxu0
      %1880 = vdwg.mxu0
      %1881 = vxpose.xlu0.c.b16.start [1/8] %v1563, 128
      %1882 = vxpose.xlu0.c.b16.cont [2/8] %v1564, 128
      %1883 = vxpose.xlu0.c.b16.cont [3/8] 0, 128
      %1884 = vxpose.xlu0.c.b16.cont [4/8] 0, 128
      %1885 = vxpose.xlu0.c.b16.cont [5/8] 0, 128
      %1886 = vxpose.xlu0.c.b16.cont [6/8] 0, 128
      %1887 = vxpose.xlu0.c.b16.cont [7/8] 0, 128
      %1888 = vxpose.xlu0.c.b16.end [8/8] 0, 128
      %v1889 = vpop.trf.xlu0
      %v1890 = vpop.trf.xlu0
      %v1891 = vpop.trf.xlu0
      %v1892 = vpop.trf.xlu0
      %v1893 = vpop.trf.xlu0
      %v1894 = vpop.trf.xlu0
      %v1895 = vpop.trf.xlu0
      %v1896 = vpop.trf.xlu0
      %v1898 = vsel %vm1601, %v1889, 0
      %1900 = vmatprep.subr.bf16.mxu0 0
      %1901 = vmatpush1.bf16.msra.mxu0 %v1579
      %1902 = vmatprep.subr.bf16.mxu0 0
      %1903 = vmatpush1.bf16.msra.mxu0 %v1580
      %1904 = vmatprep.subr.bf16.mxu0 0
      %1905 = vmatpush1.bf16.msra.mxu0 0
      %1906 = vmatprep.subr.bf16.mxu0 0
      %1907 = vmatpush1.bf16.msra.mxu0 0
      %1908 = vmatprep.subr.bf16.mxu0 0
      %1909 = vmatpush1.bf16.msra.mxu0 0
      %1910 = vmatprep.subr.bf16.mxu0 0
      %1911 = vmatpush1.bf16.msra.mxu0 0
      %1912 = vmatprep.subr.bf16.mxu0 0
      %1913 = vmatpush1.bf16.msra.mxu0 0
      %1914 = vmatprep.subr.bf16.mxu0 0
      %1915 = vmatpush1.bf16.msra.mxu0 0
      %1916 = vmatprep.subr.bf16.mxu0 0
      %1917 = vmatpush1.bf16.msra.mxu0 0
      %1918 = vmatprep.subr.bf16.mxu0 0
      %1919 = vmatpush1.bf16.msra.mxu0 0
      %1920 = vmatprep.subr.bf16.mxu0 0
      %1921 = vmatpush1.bf16.msra.mxu0 0
      %1922 = vmatprep.subr.bf16.mxu0 0
      %1923 = vmatpush1.bf16.msra.mxu0 0
      %1924 = vmatprep.subr.bf16.mxu0 0
      %1925 = vmatpush1.bf16.msra.mxu0 0
      %1926 = vmatprep.subr.bf16.mxu0 0
      %1927 = vmatpush1.bf16.msra.mxu0 0
      %1928 = vmatprep.subr.bf16.mxu0 0
      %1929 = vmatpush1.bf16.msra.mxu0 0
      %1930 = vmatprep.subr.bf16.mxu0 0
      %1931 = vmatpush1.bf16.msra.mxu0 0
      %1932 = vmatprep.mubr.bf16.mxu0 0
      %1933 = vmatmul.mubr.bf16.gmra.mrb[0].mxu0 %v1898
      %v1934 = vpop.f32.mrb[0].mxu0
      %v1935 = vadd.f32 0.0, %v1934
      %v1936 = vpop.f32.mrb[0].mxu0
      %v1937 = vpop.f32.mrb[0].mxu0
      %v1938 = vpop.f32.mrb[0].mxu0
      %1939 = vdwg.mxu0
      %1940 = vxpose.xlu0.c.b16.start [1/8] %v1565, 128
      %1941 = vxpose.xlu0.c.b16.cont [2/8] %v1566, 128
      %1942 = vxpose.xlu0.c.b16.cont [3/8] 0, 128
      %1943 = vxpose.xlu0.c.b16.cont [4/8] 0, 128
      %1944 = vxpose.xlu0.c.b16.cont [5/8] 0, 128
      %1945 = vxpose.xlu0.c.b16.cont [6/8] 0, 128
      %1946 = vxpose.xlu0.c.b16.cont [7/8] 0, 128
      %1947 = vxpose.xlu0.c.b16.end [8/8] 0, 128
      %v1948 = vpop.trf.xlu0
      %v1949 = vpop.trf.xlu0
      %v1950 = vpop.trf.xlu0
      %v1951 = vpop.trf.xlu0
      %v1952 = vpop.trf.xlu0
      %v1953 = vpop.trf.xlu0
      %v1954 = vpop.trf.xlu0
      %v1955 = vpop.trf.xlu0
      %v1957 = vsel %vm1601, %v1948, 0
      %1959 = vmatprep.subr.bf16.mxu0 0
      %1960 = vmatpush1.bf16.msra.mxu0 %v1581
      %1961 = vmatprep.subr.bf16.mxu0 0
      %1962 = vmatpush1.bf16.msra.mxu0 %v1582
      %1963 = vmatprep.subr.bf16.mxu0 0
      %1964 = vmatpush1.bf16.msra.mxu0 0
      %1965 = vmatprep.subr.bf16.mxu0 0
      %1966 = vmatpush1.bf16.msra.mxu0 0
      %1967 = vmatprep.subr.bf16.mxu0 0
      %1968 = vmatpush1.bf16.msra.mxu0 0
      %1969 = vmatprep.subr.bf16.mxu0 0
      %1970 = vmatpush1.bf16.msra.mxu0 0
      %1971 = vmatprep.subr.bf16.mxu0 0
      %1972 = vmatpush1.bf16.msra.mxu0 0
      %1973 = vmatprep.subr.bf16.mxu0 0
      %1974 = vmatpush1.bf16.msra.mxu0 0
      %1975 = vmatprep.subr.bf16.mxu0 0
      %1976 = vmatpush1.bf16.msra.mxu0 0
      %1977 = vmatprep.subr.bf16.mxu0 0
      %1978 = vmatpush1.bf16.msra.mxu0 0
      %1979 = vmatprep.subr.bf16.mxu0 0
      %1980 = vmatpush1.bf16.msra.mxu0 0
      %1981 = vmatprep.subr.bf16.mxu0 0
      %1982 = vmatpush1.bf16.msra.mxu0 0
      %1983 = vmatprep.subr.bf16.mxu0 0
      %1984 = vmatpush1.bf16.msra.mxu0 0
      %1985 = vmatprep.subr.bf16.mxu0 0
      %1986 = vmatpush1.bf16.msra.mxu0 0
      %1987 = vmatprep.subr.bf16.mxu0 0
      %1988 = vmatpush1.bf16.msra.mxu0 0
      %1989 = vmatprep.subr.bf16.mxu0 0
      %1990 = vmatpush1.bf16.msra.mxu0 0
      %1991 = vmatprep.mubr.bf16.mxu0 0
      %1992 = vmatmul.mubr.bf16.gmra.mrb[0].mxu0 %v1957
      %v1993 = vpop.f32.mrb[0].mxu0
      %v1994 = vadd.f32 0.0, %v1993
      %v1995 = vpop.f32.mrb[0].mxu0
      %v1996 = vpop.f32.mrb[0].mxu0
      %v1997 = vpop.f32.mrb[0].mxu0
      %1998 = vdwg.mxu0
      %1999 = vxpose.xlu0.c.b16.start [1/8] %v1567, 128
      %2000 = vxpose.xlu0.c.b16.cont [2/8] %v1568, 128
      %2001 = vxpose.xlu0.c.b16.cont [3/8] 0, 128
      %2002 = vxpose.xlu0.c.b16.cont [4/8] 0, 128
      %2003 = vxpose.xlu0.c.b16.cont [5/8] 0, 128
      %2004 = vxpose.xlu0.c.b16.cont [6/8] 0, 128
      %2005 = vxpose.xlu0.c.b16.cont [7/8] 0, 128
      %2006 = vxpose.xlu0.c.b16.end [8/8] 0, 128
      %v2007 = vpop.trf.xlu0
      %v2008 = vpop.trf.xlu0
      %v2009 = vpop.trf.xlu0
      %v2010 = vpop.trf.xlu0
      %v2011 = vpop.trf.xlu0
      %v2012 = vpop.trf.xlu0
      %v2013 = vpop.trf.xlu0
      %v2014 = vpop.trf.xlu0
      %v2016 = vsel %vm1601, %v2007, 0
      %2018 = vmatprep.subr.bf16.mxu0 0
      %2019 = vmatpush1.bf16.msra.mxu0 %v1583
      %2020 = vmatprep.subr.bf16.mxu0 0
      %2021 = vmatpush1.bf16.msra.mxu0 %v1584
      %2022 = vmatprep.subr.bf16.mxu0 0
      %2023 = vmatpush1.bf16.msra.mxu0 0
      %2024 = vmatprep.subr.bf16.mxu0 0
      %2025 = vmatpush1.bf16.msra.mxu0 0
      %2026 = vmatprep.subr.bf16.mxu0 0
      %2027 = vmatpush1.bf16.msra.mxu0 0
      %2028 = vmatprep.subr.bf16.mxu0 0
      %2029 = vmatpush1.bf16.msra.mxu0 0
      %2030 = vmatprep.subr.bf16.mxu0 0
      %2031 = vmatpush1.bf16.msra.mxu0 0
      %2032 = vmatprep.subr.bf16.mxu0 0
      %2033 = vmatpush1.bf16.msra.mxu0 0
      %2034 = vmatprep.subr.bf16.mxu0 0
      %2035 = vmatpush1.bf16.msra.mxu0 0
      %2036 = vmatprep.subr.bf16.mxu0 0
      %2037 = vmatpush1.bf16.msra.mxu0 0
      %2038 = vmatprep.subr.bf16.mxu0 0
      %2039 = vmatpush1.bf16.msra.mxu0 0
      %2040 = vmatprep.subr.bf16.mxu0 0
      %2041 = vmatpush1.bf16.msra.mxu0 0
      %2042 = vmatprep.subr.bf16.mxu0 0
      %2043 = vmatpush1.bf16.msra.mxu0 0
      %2044 = vmatprep.subr.bf16.mxu0 0
      %2045 = vmatpush1.bf16.msra.mxu0 0
      %2046 = vmatprep.subr.bf16.mxu0 0
      %2047 = vmatpush1.bf16.msra.mxu0 0
      %2048 = vmatprep.subr.bf16.mxu0 0
      %2049 = vmatpush1.bf16.msra.mxu0 0
      %2050 = vmatprep.mubr.bf16.mxu0 0
      %2051 = vmatmul.mubr.bf16.gmra.mrb[0].mxu0 %v2016
      %v2052 = vpop.f32.mrb[0].mxu0
      %v2053 = vadd.f32 0.0, %v2052
      %v2054 = vpop.f32.mrb[0].mxu0
      %v2055 = vpop.f32.mrb[0].mxu0
      %v2056 = vpop.f32.mrb[0].mxu0
      %2057 = vdwg.mxu0
      %v2066 = vrot.slane %v1699, 7
      %vm2067 = vcmask 1041409
      %v2068 = vsel %vm2067, %v2066, %v1640
      %v2069 = vrot.slane %v1758, 6
      %vm2070 = vcmask 1042434
      %v2071 = vsel %vm2070, %v2069, %v2068
      %v2072 = vrot.slane %v1817, 5
      %vm2073 = vcmask 1043459
      %v2074 = vsel %vm2073, %v2072, %v2071
      %v2075 = vrot.slane %v1876, 4
      %vm2076 = vcmask 1044484
      %v2077 = vsel %vm2076, %v2075, %v2074
      %v2078 = vrot.slane %v1935, 3
      %vm2079 = vcmask 1045509
      %v2080 = vsel %vm2079, %v2078, %v2077
      %v2081 = vrot.slane %v1994, 2
      %vm2082 = vcmask 1046534
      %v2083 = vsel %vm2082, %v2081, %v2080
      %v2084 = vrot.slane %v2053, 1
      %vm2085 = vcmask 1047559
      %v2086 = vsel %vm2085, %v2084, %v2083
      %2088 = vst [vmem:[%s229] sm:$0xff] %v2086
      %v2089 = vrot.slane %v1640, 1
      %v2090 = vsel %vm2067, %v1699, %v2089
      %v2091 = vrot.slane %v1758, 7
      %v2092 = vsel %vm2070, %v2091, %v2090
      %v2093 = vrot.slane %v1817, 6
      %v2094 = vsel %vm2073, %v2093, %v2092
      %v2095 = vrot.slane %v1876, 5
      %v2096 = vsel %vm2076, %v2095, %v2094
      %v2097 = vrot.slane %v1935, 4
      %v2098 = vsel %vm2079, %v2097, %v2096
      %v2099 = vrot.slane %v1994, 3
      %v2100 = vsel %vm2082, %v2099, %v2098
      %v2101 = vrot.slane %v2053, 2
      %v2102 = vsel %vm2085, %v2101, %v2100
      %2104 = vst [vmem:[%s229 + $0x8] sm:$0xff] %v2102
      %v2105 = vrot.slane %v1640, 2
      %v2106 = vrot.slane %v1699, 1
      %v2107 = vsel %vm2067, %v2106, %v2105
      %v2108 = vsel %vm2070, %v1758, %v2107
      %v2109 = vrot.slane %v1817, 7
      %v2110 = vsel %vm2073, %v2109, %v2108
      %v2111 = vrot.slane %v1876, 6
      %v2112 = vsel %vm2076, %v2111, %v2110
      %v2113 = vrot.slane %v1935, 5
      %v2114 = vsel %vm2079, %v2113, %v2112
      %v2115 = vrot.slane %v1994, 4
      %v2116 = vsel %vm2082, %v2115, %v2114
      %v2117 = vrot.slane %v2053, 3
      %v2118 = vsel %vm2085, %v2117, %v2116
      %2120 = vst [vmem:[%s229 + $0x10] sm:$0xff] %v2118
      %v2121 = vrot.slane %v1640, 3
      %v2122 = vrot.slane %v1699, 2
      %v2123 = vsel %vm2067, %v2122, %v2121
      %v2124 = vrot.slane %v1758, 1
      %v2125 = vsel %vm2070, %v2124, %v2123
      %v2126 = vsel %vm2073, %v1817, %v2125
      %v2127 = vrot.slane %v1876, 7
      %v2128 = vsel %vm2076, %v2127, %v2126
      %v2129 = vrot.slane %v1935, 6
      %v2130 = vsel %vm2079, %v2129, %v2128
      %v2131 = vrot.slane %v1994, 5
      %v2132 = vsel %vm2082, %v2131, %v2130
      %v2133 = vrot.slane %v2053, 4
      %v2134 = vsel %vm2085, %v2133, %v2132
      %2136 = vst [vmem:[%s229 + $0x18] sm:$0xff] %v2134
      %v2137 = vrot.slane %v1640, 4
      %v2138 = vrot.slane %v1699, 3
      %v2139 = vsel %vm2067, %v2138, %v2137
      %v2140 = vrot.slane %v1758, 2
      %v2141 = vsel %vm2070, %v2140, %v2139
      %v2142 = vrot.slane %v1817, 1
      %v2143 = vsel %vm2073, %v2142, %v2141
      %v2144 = vsel %vm2076, %v1876, %v2143
      %v2145 = vrot.slane %v1935, 7
      %v2146 = vsel %vm2079, %v2145, %v2144
      %v2147 = vrot.slane %v1994, 6
      %v2148 = vsel %vm2082, %v2147, %v2146
      %v2149 = vrot.slane %v2053, 5
      %v2150 = vsel %vm2085, %v2149, %v2148
      %2152 = vst [vmem:[%s229 + $0x20] sm:$0xff] %v2150
      %v2153 = vrot.slane %v1640, 5
      %v2154 = vrot.slane %v1699, 4
      %v2155 = vsel %vm2067, %v2154, %v2153
      %v2156 = vrot.slane %v1758, 3
      %v2157 = vsel %vm2070, %v2156, %v2155
      %v2158 = vrot.slane %v1817, 2
      %v2159 = vsel %vm2073, %v2158, %v2157
      %v2160 = vrot.slane %v1876, 1
      %v2161 = vsel %vm2076, %v2160, %v2159
      %v2162 = vsel %vm2079, %v1935, %v2161
      %v2163 = vrot.slane %v1994, 7
      %v2164 = vsel %vm2082, %v2163, %v2162
      %v2165 = vrot.slane %v2053, 6
      %v2166 = vsel %vm2085, %v2165, %v2164
      %2168 = vst [vmem:[%s229 + $0x28] sm:$0xff] %v2166
      %v2169 = vrot.slane %v1640, 6
      %v2170 = vrot.slane %v1699, 5
      %v2171 = vsel %vm2067, %v2170, %v2169
      %v2172 = vrot.slane %v1758, 4
      %v2173 = vsel %vm2070, %v2172, %v2171
      %v2174 = vrot.slane %v1817, 3
      %v2175 = vsel %vm2073, %v2174, %v2173
      %v2176 = vrot.slane %v1876, 2
      %v2177 = vsel %vm2076, %v2176, %v2175
      %v2178 = vrot.slane %v1935, 1
      %v2179 = vsel %vm2079, %v2178, %v2177
      %v2180 = vsel %vm2082, %v1994, %v2179
      %v2181 = vrot.slane %v2053, 7
      %v2182 = vsel %vm2085, %v2181, %v2180
      %2184 = vst [vmem:[%s229 + $0x30] sm:$0xff] %v2182
      %v2185 = vrot.slane %v1640, 7
      %v2186 = vrot.slane %v1699, 6
      %v2187 = vsel %vm2067, %v2186, %v2185
      %v2188 = vrot.slane %v1758, 5
      %v2189 = vsel %vm2070, %v2188, %v2187
      %v2190 = vrot.slane %v1817, 4
      %v2191 = vsel %vm2073, %v2190, %v2189
      %v2192 = vrot.slane %v1876, 3
      %v2193 = vsel %vm2076, %v2192, %v2191
      %v2194 = vrot.slane %v1935, 2
      %v2195 = vsel %vm2079, %v2194, %v2193
      %v2196 = vrot.slane %v1994, 1
      %v2197 = vsel %vm2082, %v2196, %v2195
      %v2198 = vsel %vm2085, %v2053, %v2197
      %2200 = vst [vmem:[%s229 + $0x38] sm:$0xff] %v2198
      %p2201 = scmp.lt.s32.totalorder %s16, 1
      %s2202 = scalar_select %p2201, %s16, 1
      %s2203 = smul.addr %s2202, 8
      %s2204 = smul.addr %s2203, 8
      %s2205 = scalar_lea.vmem %s5, %s2204
      // Predicated region
      $region41: #{_lambda_.1} parent=39 // pred_check
        %p2206 = pneg %p144
      $region42: #{_lambda_.1} parent=39 // pred_check_branch
        %2208 = sbr.rel (%p2206) target = $region44
      $region43: #{_lambda_.1} parent=39 // pred_region
        _
      $region44: #{_lambda_.1} parent=39 // pred_fallthru
        _
    $region40: #{_lambda_.1} parent=5 // pred_fallthru
      _
    %p2209 = scmp.le.s32.totalorder 2, %s11
    // Predicated region
    $region45: #{_lambda_.1} parent=5 // pred_check
      %p2210 = pneg %p2209
    $region46: #{_lambda_.1} parent=5 // pred_check_branch
      %2212 = sbr.rel (%p2210) target = $region48
    $region47: #{_lambda_.1} parent=5 // pred_region
      %s2213 = ssub.s32 %s11, 2
      // Predicated region
      $region49: #{_lambda_.1} parent=47 // pred_check
        %p2214 = pneg %p150
      $region50: #{_lambda_.1} parent=47 // pred_check_branch
        %2216 = sbr.rel (%p2214) target = $region52
      $region51: #{_lambda_.1} parent=47 // pred_region
        %p2217 = scmp.lt.s32.totalorder %s17, 1
        %s2218 = scalar_select %p2217, %s17, 1
        %s2219 = smul.addr %s2218, 8
        %s2220 = smul.addr %s2219, 8
        %s2221 = scalar_lea.vmem %s5, %s2220
      $region52: #{_lambda_.1} parent=47 // pred_fallthru
        _
    $region48: #{_lambda_.1} parent=5 // pred_fallthru
      _
  $region6: #{_lambda_.1} parent=0 // loop_footer
    %s15 = sadd.s32 1, %s11
  $region7: #{_lambda_.1} parent=0 // loop_footer_branch
    %10 = sbr.rel target = $region3
  $region8: #{_lambda_.1} parent=0 // loop_exit
    _

</llo_original>
